<compile_context>
chip_gen: v5e
topology: v5e:2x2
jax: 0.10.0
libtpu: 0.0.40
codegen_flags: <defaults>
</compile_context>

<pallas_src>
import functools

import jax
import jax.numpy as jnp
import numpy as np
from jax.experimental import pallas as pl
from jax.experimental.pallas import tpu as pltpu


# ----------------------------------------------------------------------------
# VGG16 `features` layer list (torchvision ordering).
# ----------------------------------------------------------------------------
VGG16_FEATURES = [
    ("conv", 3, 64), ("relu",), ("conv", 64, 64), ("relu",), ("pool",),
    ("conv", 64, 128), ("relu",), ("conv", 128, 128), ("relu",), ("pool",),
    ("conv", 128, 256), ("relu",), ("conv", 256, 256), ("relu",),
    ("conv", 256, 256), ("relu",), ("pool",),
    ("conv", 256, 512), ("relu",), ("conv", 512, 512), ("relu",),
    ("conv", 512, 512), ("relu",), ("pool",),
    ("conv", 512, 512), ("relu",), ("conv", 512, 512), ("relu",),
    ("conv", 512, 512), ("relu",), ("pool",),
]


# ----------------------------------------------------------------------------
# Fused 3x3 "same" conv (+ bias, optional ReLU, optional 2x2/stride-2 max-pool).
# ----------------------------------------------------------------------------
def _conv3x3_kernel(x_ref, w_ref, b_ref, o_ref, *, apply_relu, apply_pool):
    # x_ref: (1, H, W, Cin)   un-padded input tile (one batch element)
    # w_ref: (9, Cin, TC)     bf16, 3x3 taps flattened on leading axis
    # b_ref: (1, TC)          f32
    # o_ref: (1, Ho, Wo, TC)  Ho,Wo = H,W (no pool) or H//2,W//2 (fused pool)
    H, W, Cin = x_ref.shape[1], x_ref.shape[2], x_ref.shape[3]
    TC = o_ref.shape[3]

    x = x_ref[0].astype(jnp.bfloat16)                      # (H, W, Cin)
    # Zero-pad the halo locally in VMEM (no HBM pad pass).
    zr = jnp.zeros((1, W, Cin), jnp.bfloat16)
    xh = jnp.concatenate([zr, x, zr], axis=0)              # (H+2, W, Cin)
    zc = jnp.zeros((H + 2, 1, Cin), jnp.bfloat16)
    xp = jnp.concatenate([zc, xh, zc], axis=1)             # (H+2, W+2, Cin)

    if Cin <= 16:
        # im2col: one K = 9*Cin matmul keeps the MXU fed for the RGB layer.
        cols = [xp[dy:dy + H, dx:dx + W, :]
                for dy in range(3) for dx in range(3)]
        patch = jnp.concatenate(cols, axis=-1).reshape(H * W, 9 * Cin)
        wmat = w_ref[...].reshape(9 * Cin, TC)
        acc = jnp.dot(patch, wmat, preferred_element_type=jnp.float32)
    else:
        acc = jnp.zeros((H * W, TC), jnp.float32)
        for dy in range(3):
            for dx in range(3):
                patch = xp[dy:dy + H, dx:dx + W, :].reshape(H * W, Cin)
                acc = acc + jnp.dot(patch, w_ref[dy * 3 + dx],
                                    preferred_element_type=jnp.float32)

    acc = acc + b_ref[...]                                 # (1, TC) broadcast
    if apply_relu:
        acc = jnp.maximum(acc, 0.0)
    y = acc.reshape(H, W, TC)
    if apply_pool:
        y = y.reshape(H // 2, 2, W // 2, 2, TC)
        y = jnp.max(jnp.max(y, axis=3), axis=1)            # (H//2, W//2, TC)
    o_ref[0] = y.astype(o_ref.dtype)


def conv3x3_block(x, w9_bf16, b2, *, apply_relu, apply_pool):
    # x: (N, H, W, Cin) f32 ; w9_bf16: (9, Cin, Cout) bf16 ; b2: (1, Cout) f32
    N, H, W, Cin = x.shape
    Cout = w9_bf16.shape[-1]
    TC = Cout if Cout <= 256 else 256          # lane-friendly Cout tiles
    n_ct = Cout // TC
    Ho, Wo = (H // 2, W // 2) if apply_pool else (H, W)

    kernel = functools.partial(_conv3x3_kernel,
                               apply_relu=apply_relu, apply_pool=apply_pool)
    flops = 2 * N * H * W * Cin * Cout * 9
    bytes_accessed = (N * H * W * Cin * 4 * n_ct          # activations (re-read per Cout tile)
                      + 9 * Cin * Cout * 2                # bf16 weights
                      + Cout * 4                          # bias
                      + N * Ho * Wo * Cout * 4)           # output

    return pl.pallas_call(
        kernel,
        out_shape=jax.ShapeDtypeStruct((N, Ho, Wo, Cout), jnp.float32),
        grid=(n_ct, N),
        in_specs=[
            pl.BlockSpec((1, H, W, Cin), lambda c, n: (n, 0, 0, 0)),
            pl.BlockSpec((9, Cin, TC), lambda c, n: (0, 0, c)),   # resident across n
            pl.BlockSpec((1, TC), lambda c, n: (0, c)),
        ],
        out_specs=pl.BlockSpec((1, Ho, Wo, TC), lambda c, n: (n, 0, 0, c)),
        compiler_params=pltpu.CompilerParams(
            dimension_semantics=("parallel", "parallel"),
            vmem_limit_bytes=48 * 1024 * 1024),
        cost_estimate=pl.CostEstimate(flops=flops, transcendentals=0,
                                      bytes_accessed=bytes_accessed),
    )(x, w9_bf16, b2)


# ----------------------------------------------------------------------------
# Standalone ReLU kernel (only used when the preceding conv output must be
# collected pre-ReLU, so the ReLU cannot be fused).
# ----------------------------------------------------------------------------
def _relu_kernel(x_ref, o_ref):
    o_ref[...] = jnp.maximum(x_ref[...], 0.0)


def relu(x):
    N, H, W, C = x.shape
    return pl.pallas_call(
        _relu_kernel,
        out_shape=jax.ShapeDtypeStruct(x.shape, x.dtype),
        grid=(N,),
        in_specs=[pl.BlockSpec((1, H, W, C), lambda n: (n, 0, 0, 0))],
        out_specs=pl.BlockSpec((1, H, W, C), lambda n: (n, 0, 0, 0)),
        compiler_params=pltpu.CompilerParams(
            dimension_semantics=("parallel",)),
    )(x)


# ----------------------------------------------------------------------------
# Standalone 2x2/stride-2 max-pool kernel (reshape + max in registers; no
# strided ref reads, no VMEM scratch).
# ----------------------------------------------------------------------------
def _maxpool2x2_kernel(x_ref, o_ref):
    Ho, Wo, C = o_ref.shape[1], o_ref.shape[2], o_ref.shape[3]
    x = x_ref[0]                                   # (H, W, C)
    x = x.reshape(Ho, 2, Wo, 2, C)
    o_ref[0] = jnp.max(jnp.max(x, axis=3), axis=1)


def maxpool2x2(x):
    N, H, W, C = x.shape
    Ho, Wo = H // 2, W // 2
    return pl.pallas_call(
        _maxpool2x2_kernel,
        out_shape=jax.ShapeDtypeStruct((N, Ho, Wo, C), x.dtype),
        grid=(N,),
        in_specs=[pl.BlockSpec((1, H, W, C), lambda n: (n, 0, 0, 0))],
        out_specs=pl.BlockSpec((1, Ho, Wo, C), lambda n: (n, 0, 0, 0)),
        compiler_params=pltpu.CompilerParams(
            dimension_semantics=("parallel",)),
    )(x)


# ----------------------------------------------------------------------------
# NetVGGFeatures equivalent.
# ----------------------------------------------------------------------------
class NetVGGFeatures:
    def __init__(self, layer_ids, key):
        self.layer_ids = list(layer_ids)
        self.params = {}          # f32 (bf16-representable) copies for reference
        self.kernel_params = {}   # (9,Cin,Cout) bf16 weights + (1,Cout) f32 bias
        for i in range(self.layer_ids[-1] + 1):
            cfg = VGG16_FEATURES[i]
            if cfg[0] == "conv":
                cin, cout = cfg[1], cfg[2]
                kw = jax.random.fold_in(key, 2 * i)
                kb = jax.random.fold_in(key, 2 * i + 1)
                scale = 1.0 / np.sqrt(9.0 * cin)
                w = jax.random.normal(kw, (3, 3, cin, cout), jnp.float32) * scale
                # Round weights to bf16-representable values so the MXU path and
                # the f32 reference see numerically identical parameters.
                w = w.astype(jnp.bfloat16).astype(jnp.float32)
                b = (jax.random.normal(kb, (cout,), jnp.float32) * 0.01)
                self.params[i] = (w, b)
                self.kernel_params[i] = (
                    w.reshape(9, cin, cout).astype(jnp.bfloat16),
                    b.reshape(1, cout),
                )

    def __call__(self, x_nchw):
        # x_nchw: (N, C, H, W) like PyTorch.
        x = jnp.transpose(x_nchw, (0, 2, 3, 1)).astype(jnp.float32)  # -> NHWC
        outputs = []
        last = self.layer_ids[-1]
        i = 0
        while i <= last:
            cfg = VGG16_FEATURES[i]
            if cfg[0] == "conv":
                w9, b2 = self.kernel_params[i]
                end = i
                # Greedy fusion; break whenever an intermediate output is needed
                # (so collected tensors keep exact PyTorch semantics).
                fuse_relu = (end not in self.layer_ids and end + 1 <= last
                             and VGG16_FEATURES[end + 1][0] == "relu")
                if fuse_relu:
                    end += 1
                fuse_pool = (fuse_relu and end not in self.layer_ids
                             and end + 1 <= last
                             and VGG16_FEATURES[end + 1][0] == "pool"
                             and x.shape[1] % 2 == 0 and x.shape[2] % 2 == 0)
                if fuse_pool:
                    end += 1
                x = conv3x3_block(x, w9, b2,
                                  apply_relu=fuse_relu, apply_pool=fuse_pool)
                if end in self.layer_ids:
                    outputs.append(jnp.transpose(x, (0, 3, 1, 2)))
                i = end + 1
            elif cfg[0] == "relu":
                x = relu(x)
                if i in self.layer_ids:
                    outputs.append(jnp.transpose(x, (0, 3, 1, 2)))
                i += 1
            else:  # "pool"
                x = maxpool2x2(x)
                if i in self.layer_ids:
                    outputs.append(jnp.transpose(x, (0, 3, 1, 2)))
                i += 1
        return outputs


# ----------------------------------------------------------------------------
# Pure-JAX f32 reference (for correctness check only).
# ----------------------------------------------------------------------------
def ref_forward(model, x_nchw):
    x = jnp.transpose(x_nchw, (0, 2, 3, 1)).astype(jnp.float32)
    outs = []
    for i in range(model.layer_ids[-1] + 1):
        cfg = VGG16_FEATURES[i]
        if cfg[0] == "conv":
            w, b = model.params[i]
            x = jax.lax.conv_general_dilated(
                x, w, window_strides=(1, 1), padding="SAME",
                dimension_numbers=("NHWC", "HWIO", "NHWC")) + b
        elif cfg[0] == "relu":
            x = jnp.maximum(x, 0.0)
        else:
            x = jax.lax.reduce_window(x, -jnp.inf, jax.lax.max,
                                      (1, 2, 2, 1), (1, 2, 2, 1), "VALID")
        if i in model.layer_ids:
            outs.append(jnp.transpose(x, (0, 3, 1, 2)))
    return outs


if __name__ == "__main__":
    key = jax.random.PRNGKey(0)
    # layer_ids = [2, 7]: collect the pre-ReLU outputs of the 2nd and 4th convs.
    layer_ids = [2, 7]
    model = NetVGGFeatures(layer_ids, jax.random.fold_in(key, 1))

    # Input matches PyTorch's NCHW convention; VGG16 requires 3 input channels.
    x = jax.random.normal(jax.random.fold_in(key, 0), (2, 3, 16, 16), jnp.float32)

    outs = model(x)
    outs = [jax.block_until_ready(o) for o in outs]

    refs = ref_forward(model, x)
    expected_shapes = [(2, 64, 16, 16), (2, 128, 8, 8)]

    ok = len(outs) == len(expected_shapes)
    for o, r, s in zip(outs, refs, expected_shapes):
        ok &= (o.shape == s)
        ok &= bool(np.all(np.isfinite(np.asarray(o))))
        # bf16 MXU path vs f32 reference -> slightly loosened tolerance.
        ok &= bool(np.allclose(np.asarray(o), np.asarray(r),
                               rtol=3e-2, atol=3e-2))

    print("KERNEL_OK" if ok else "KERNEL_MISMATCH")
</pallas_src>

<mosaic_0001>
module attributes {stable_mosaic.version = 11 : i64} {
  func.func @_conv3x3_kernel(%arg0: i32, %arg1: i32, %arg2: memref<1x16x16x3xf32, #tpu.memory_space<vmem>>, %arg3: memref<9x3x64xbf16, #tpu.memory_space<vmem>>, %arg4: memref<1x64xf32, #tpu.memory_space<vmem>>, %arg5: memref<1x16x16x64xf32, #tpu.memory_space<vmem>>) attributes {dimension_semantics = [#tpu.dimension_semantics<parallel>, #tpu.dimension_semantics<parallel>], iteration_bounds = array<i64: 1, 2>, scalar_prefetch = 0 : i64, scratch_operands = 0 : i64, tpu.core_type = #tpu.core_type<tc>, window_params = [{transform_indices = @transform_0, window_bounds = array<i64: 1, 16, 16, 3>}, {transform_indices = @transform_1, window_bounds = array<i64: 9, 3, 64>}, {transform_indices = @transform_2, window_bounds = array<i64: 1, 64>}, {transform_indices = @transform_3, window_bounds = array<i64: 1, 16, 16, 64>}]} {
    %c0 = arith.constant 0 : index
    %c0_0 = arith.constant 0 : index
    %c0_1 = arith.constant 0 : index
    %c0_2 = arith.constant 0 : index
    %0 = vector.load %arg2[%c0, %c0_0, %c0_1, %c0_2] : memref<1x16x16x3xf32, #tpu.memory_space<vmem>>, vector<1x16x16x3xf32>
    %1 = vector.shape_cast %0 : vector<1x16x16x3xf32> to vector<16x16x3xf32>
    %2 = arith.truncf %1 : vector<16x16x3xf32> to vector<16x16x3xbf16>
    %cst = arith.constant 0.000000e+00 : bf16
    %3 = vector.broadcast %cst : bf16 to vector<1x16x3xbf16>
    %4 = tpu.concatenate %3, %2, %3 in 0 : vector<1x16x3xbf16>, vector<16x16x3xbf16>, vector<1x16x3xbf16> -> vector<18x16x3xbf16>
    %cst_3 = arith.constant 0.000000e+00 : bf16
    %5 = vector.broadcast %cst_3 : bf16 to vector<18x1x3xbf16>
    %6 = tpu.concatenate %5, %4, %5 in 1 : vector<18x1x3xbf16>, vector<18x16x3xbf16>, vector<18x1x3xbf16> -> vector<18x18x3xbf16>
    %7 = vector.extract_strided_slice %6 {offsets = [0, 0, 0], sizes = [16, 16, 3], strides = [1, 1, 1]} : vector<18x18x3xbf16> to vector<16x16x3xbf16>
    %8 = vector.extract_strided_slice %6 {offsets = [0, 1, 0], sizes = [16, 16, 3], strides = [1, 1, 1]} : vector<18x18x3xbf16> to vector<16x16x3xbf16>
    %9 = vector.extract_strided_slice %6 {offsets = [0, 2, 0], sizes = [16, 16, 3], strides = [1, 1, 1]} : vector<18x18x3xbf16> to vector<16x16x3xbf16>
    %10 = vector.extract_strided_slice %6 {offsets = [1, 0, 0], sizes = [16, 16, 3], strides = [1, 1, 1]} : vector<18x18x3xbf16> to vector<16x16x3xbf16>
    %11 = vector.extract_strided_slice %6 {offsets = [1, 1, 0], sizes = [16, 16, 3], strides = [1, 1, 1]} : vector<18x18x3xbf16> to vector<16x16x3xbf16>
    %12 = vector.extract_strided_slice %6 {offsets = [1, 2, 0], sizes = [16, 16, 3], strides = [1, 1, 1]} : vector<18x18x3xbf16> to vector<16x16x3xbf16>
    %13 = vector.extract_strided_slice %6 {offsets = [2, 0, 0], sizes = [16, 16, 3], strides = [1, 1, 1]} : vector<18x18x3xbf16> to vector<16x16x3xbf16>
    %14 = vector.extract_strided_slice %6 {offsets = [2, 1, 0], sizes = [16, 16, 3], strides = [1, 1, 1]} : vector<18x18x3xbf16> to vector<16x16x3xbf16>
    %15 = vector.extract_strided_slice %6 {offsets = [2, 2, 0], sizes = [16, 16, 3], strides = [1, 1, 1]} : vector<18x18x3xbf16> to vector<16x16x3xbf16>
    %16 = tpu.concatenate %7, %8, %9, %10, %11, %12, %13, %14, %15 in 2 : vector<16x16x3xbf16>, vector<16x16x3xbf16>, vector<16x16x3xbf16>, vector<16x16x3xbf16>, vector<16x16x3xbf16>, vector<16x16x3xbf16>, vector<16x16x3xbf16>, vector<16x16x3xbf16>, vector<16x16x3xbf16> -> vector<16x16x27xbf16>
    %17 = vector.shape_cast %16 : vector<16x16x27xbf16> to vector<256x27xbf16>
    %c0_4 = arith.constant 0 : index
    %c0_5 = arith.constant 0 : index
    %c0_6 = arith.constant 0 : index
    %18 = vector.load %arg3[%c0_4, %c0_5, %c0_6] : memref<9x3x64xbf16, #tpu.memory_space<vmem>>, vector<9x3x64xbf16>
    %19 = vector.shape_cast %18 : vector<9x3x64xbf16> to vector<27x64xbf16>
    %cst_7 = arith.constant dense<0.000000e+00> : vector<256x64xf32>
    %20 = tpu.matmul %17, %19, %cst_7 {dimension_numbers = #tpu.dot_dimension_numbers<[1], [0], [0], [1], [0, 0, 1, 1], [], []>} : vector<256x27xbf16>, vector<27x64xbf16>, vector<256x64xf32> -> vector<256x64xf32>
    %c0_8 = arith.constant 0 : index
    %c0_9 = arith.constant 0 : index
    %21 = vector.load %arg4[%c0_8, %c0_9] : memref<1x64xf32, #tpu.memory_space<vmem>>, vector<1x64xf32>
    %22 = vector.broadcast %21 : vector<1x64xf32> to vector<256x64xf32>
    %23 = arith.addf %20, %22 : vector<256x64xf32>
    %cst_10 = arith.constant 0.000000e+00 : f32
    %24 = vector.broadcast %cst_10 : f32 to vector<256x64xf32>
    %25 = arith.maximumf %23, %24 : vector<256x64xf32>
    %26 = vector.shape_cast %25 : vector<256x64xf32> to vector<16x16x64xf32>
    %c0_11 = arith.constant 0 : index
    %c0_12 = arith.constant 0 : index
    %c0_13 = arith.constant 0 : index
    %c0_14 = arith.constant 0 : index
    %27 = vector.load %arg5[%c0_11, %c0_12, %c0_13, %c0_14] : memref<1x16x16x64xf32, #tpu.memory_space<vmem>>, vector<1x16x16x64xf32>
    %28 = vector.shape_cast %27 : vector<1x16x16x64xf32> to vector<16x16x64xf32>
    %29 = vector.shape_cast %26 : vector<16x16x64xf32> to vector<1x16x16x64xf32>
    tpu.vector_store %arg5[%c0_11, %c0_12, %c0_13, %c0_14], %29 {strides = array<i32>} : memref<1x16x16x64xf32, #tpu.memory_space<vmem>>, vector<1x16x16x64xf32>,
    return
  }
  func.func @transform_0(%arg0: i32, %arg1: i32) -> (i32, i32, i32, i32) {
    %c0_i32 = arith.constant 0 : i32
    %c0_i32_0 = arith.constant 0 : i32
    %c0_i32_1 = arith.constant 0 : i32
    %c0_i32_2 = arith.constant 0 : i32
    return %arg1, %c0_i32, %c0_i32_0, %c0_i32_1 : i32, i32, i32, i32
  }
  func.func @transform_1(%arg0: i32, %arg1: i32) -> (i32, i32, i32) {
    %c0_i32 = arith.constant 0 : i32
    %c0_i32_0 = arith.constant 0 : i32
    %c0_i32_1 = arith.constant 0 : i32
    return %c0_i32, %c0_i32_0, %arg0 : i32, i32, i32
  }
  func.func @transform_2(%arg0: i32, %arg1: i32) -> (i32, i32) {
    %c0_i32 = arith.constant 0 : i32
    %c0_i32_0 = arith.constant 0 : i32
    return %c0_i32, %arg0 : i32, i32
  }
  func.func @transform_3(%arg0: i32, %arg1: i32) -> (i32, i32, i32, i32) {
    %c0_i32 = arith.constant 0 : i32
    %c0_i32_0 = arith.constant 0 : i32
    %c0_i32_1 = arith.constant 0 : i32
    return %arg1, %c0_i32, %c0_i32_0, %arg0 : i32, i32, i32, i32
  }
}

</mosaic_0001>

<llo_original>
// kernel: tpu_custom_call.1
$region0: #{tpu_custom_call.1}
  #allocation0 [shape = 'u32[]', space=smem, size = 0x4, offset = 0x4, fixed_abs, tag = 'smem constant byte address 0x4 - core index']
  #allocation1 [shape = 'u32[72,128]{1,0:T(1,128)}', space=vmem, size = 0x9000, scoped, tag = 'internal scratch']
  %s0 = inlined_call_operand.vmem [shape: f32[2,16,16,3], index: 0, kind: input, shape index: {}]
  %s1 = inlined_call_operand.vmem [shape: bf16[9,3,64], index: 1, kind: input, shape index: {}]
  %s2 = inlined_call_operand.vmem [shape: f32[1,64], index: 2, kind: input, shape index: {}]
  %s3 = inlined_call_operand.hbm [shape: f32[2,16,16,64], index: 3, kind: output, shape index: {}]
  %s4 = sld [smem:[#allocation0]]
  $region45: #{tpu_custom_call.1} parent=0
    _
  %s6 = ssub.s32 1, %s4
  %s7 = scalar_select 0, %s6, %s4
  $region1: #{tpu_custom_call.1} parent=0
    #allocation2 [shape = 'u8[262144]{0}', space=vmem, size = 0x40000, scoped, tag = 'output window, operand 0']
    #allocation3 [shape = 's32[2]{0}', space=sflag, size = 0x8, scoped, tag = 'scoped memory for tpu_custom_call.1']
    %8 = vsyncpa [#allocation3], 0
    %s9 = scalar_lea.sflag [#allocation3], 1
    %10 = vsyncpa %s9, 0
    loop: start=0, step=1, limit=4
    $region2: #{tpu_custom_call.1} parent=1 // loop_pre_header
      _
    $region3: #{tpu_custom_call.1} parent=1 // loop_header
      %s12 = sphi 0, %s16
      %p13 = scmp.ge.s32.totalorder %s12, 4
      %s19 = sphi 0, %s31
      %s20 = sphi 0, %s27
      %s21 = sphi 0, %s19
      %s22 = sphi 0, %s20
      %s23 = sphi 0, %s21
      %s24 = sphi 0, %s22
      %s34 = sphi 0, %s36
      %s37 = sphi 0, %s34
      %s38 = sphi 0, %s37
      %s54 = sphi 0, %s38
      %s60 = sphi 0, %s62
      %s63 = sphi 0, %s60
      %s64 = sphi 0, %s63
      %s80 = sphi 0, %s64
      %s86 = sphi 0, %s88
      %s89 = sphi 0, %s86
      %s90 = sphi 0, %s89
      %s106 = sphi 0, %s90
      %s114 = sphi 0, %s116
      %s117 = sphi 0, %s114
      %s118 = sphi 0, %s117
      %s134 = sphi 0, %s118
    $region4: #{tpu_custom_call.1} parent=1 // loop_header_branch
      %15 = sbr.rel (%p13) target = $region8
    $region5: #{tpu_custom_call.1} parent=1 // loop_body
      %s17 = ssub.s32 %s12, 1
      %s18 = ssub.s32 %s12, 2
      %s25 = sadd.s32 1, %s20
      %p26 = scmp.ge.s32.totalorder %s25, 2
      %s27 = scalar_select %p26, 0, %s25
      %s28 = sadd.s32 1, %s19
      %s29 = scalar_select %p26, %s28, %s19
      %p30 = scmp.ge.s32.totalorder %s29, 1
      %s31 = scalar_select %p30, 0, %s29
      %s32 = ssub.s32 %s20, %s27
      %p33 = scmp.eq.s32.totalorder %s32, 0
      %s35 = sadd.s32 %s34, 1
      %s36 = scalar_select %p33, %s34, %s35
      %p39 = pneg %p33
      %p40 = scmp.eq.s32.totalorder %s12, 1
      %p41 = por %p39, %p40
      %p42 = scmp.ne.s32.totalorder %s34, %s37
      %p43 = scmp.eq.s32.totalorder %s12, 0
      %p44 = por %p42, %p43
      %p45 = scmp.ne.s32.totalorder %s34, %s37
      %p46 = scmp.eq.s32.totalorder %s17, 1
      %p47 = por %p45, %p46
      %p48 = scmp.ne.s32.totalorder %s37, %s38
      %p49 = scmp.eq.s32.totalorder %s17, 0
      %p50 = por %p48, %p49
      %p51 = scmp.ne.s32.totalorder %s37, %s38
      %p52 = scmp.eq.s32.totalorder %s18, 1
      %p53 = por %p51, %p52
      %p55 = scmp.ne.s32.totalorder %s38, %s54
      %p56 = scmp.eq.s32.totalorder %s18, 0
      %p57 = por %p55, %p56
      %s58 = ssub.s32 %s19, %s31
      %p59 = scmp.eq.s32.totalorder %s58, 0
      %s61 = sadd.s32 %s60, 1
      %s62 = scalar_select %p59, %s60, %s61
      %p65 = pneg %p59
      %p66 = scmp.eq.s32.totalorder %s12, 1
      %p67 = por %p65, %p66
      %p68 = scmp.ne.s32.totalorder %s60, %s63
      %p69 = scmp.eq.s32.totalorder %s12, 0
      %p70 = por %p68, %p69
      %p71 = scmp.ne.s32.totalorder %s60, %s63
      %p72 = scmp.eq.s32.totalorder %s17, 1
      %p73 = por %p71, %p72
      %p74 = scmp.ne.s32.totalorder %s63, %s64
      %p75 = scmp.eq.s32.totalorder %s17, 0
      %p76 = por %p74, %p75
      %p77 = scmp.ne.s32.totalorder %s63, %s64
      %p78 = scmp.eq.s32.totalorder %s18, 1
      %p79 = por %p77, %p78
      %p81 = scmp.ne.s32.totalorder %s64, %s80
      %p82 = scmp.eq.s32.totalorder %s18, 0
      %p83 = por %p81, %p82
      %s84 = ssub.s32 %s19, %s31
      %p85 = scmp.eq.s32.totalorder %s84, 0
      %s87 = sadd.s32 %s86, 1
      %s88 = scalar_select %p85, %s86, %s87
      %p91 = pneg %p85
      %p92 = scmp.eq.s32.totalorder %s12, 1
      %p93 = por %p91, %p92
      %p94 = scmp.ne.s32.totalorder %s86, %s89
      %p95 = scmp.eq.s32.totalorder %s12, 0
      %p96 = por %p94, %p95
      %p97 = scmp.ne.s32.totalorder %s86, %s89
      %p98 = scmp.eq.s32.totalorder %s17, 1
      %p99 = por %p97, %p98
      %p100 = scmp.ne.s32.totalorder %s89, %s90
      %p101 = scmp.eq.s32.totalorder %s17, 0
      %p102 = por %p100, %p101
      %p103 = scmp.ne.s32.totalorder %s89, %s90
      %p104 = scmp.eq.s32.totalorder %s18, 1
      %p105 = por %p103, %p104
      %p107 = scmp.ne.s32.totalorder %s90, %s106
      %p108 = scmp.eq.s32.totalorder %s18, 0
      %p109 = por %p107, %p108
      %s110 = ssub.s32 %s20, %s27
      %s111 = ssub.s32 %s19, %s31
      %s112 = sor.u32 %s110, %s111
      %p113 = scmp.eq.s32.totalorder %s112, 0
      %s115 = sadd.s32 %s114, 1
      %s116 = scalar_select %p113, %s114, %s115
      %p119 = pneg %p113
      %p120 = scmp.eq.s32.totalorder %s12, 1
      %p121 = por %p119, %p120
      %p122 = scmp.ne.s32.totalorder %s114, %s117
      %p123 = scmp.eq.s32.totalorder %s12, 0
      %p124 = por %p122, %p123
      %p125 = scmp.ne.s32.totalorder %s114, %s117
      %p126 = scmp.eq.s32.totalorder %s17, 1
      %p127 = por %p125, %p126
      %p128 = scmp.ne.s32.totalorder %s117, %s118
      %p129 = scmp.eq.s32.totalorder %s17, 0
      %p130 = por %p128, %p129
      %p131 = scmp.ne.s32.totalorder %s117, %s118
      %p132 = scmp.eq.s32.totalorder %s18, 1
      %p133 = por %p131, %p132
      %p135 = scmp.ne.s32.totalorder %s118, %s134
      %p136 = scmp.eq.s32.totalorder %s18, 0
      %p137 = por %p135, %p136
      %p138 = scmp.le.s32.totalorder 1, %s12
      %p139 = scmp.lt.s32.totalorder %s12, 3
      %p140 = pnand %p138, %p139
      %p141 = pneg %p140
      // Predicated region
      $region9: #{tpu_custom_call.1} parent=5 // pred_check
        _
      $region10: #{tpu_custom_call.1} parent=5 // pred_check_branch
        %143 = sbr.rel (%p140) target = $region12
      $region11: #{tpu_custom_call.1} parent=5 // pred_region
        %s144 = ssub.s32 %s12, 1
        // Predicated region
        $region13: #{tpu_custom_call.1} parent=11 // pred_check
          %p145 = pneg %p76
        $region14: #{tpu_custom_call.1} parent=11 // pred_check_branch
          %147 = sbr.rel (%p145) target = $region16
        $region15: #{tpu_custom_call.1} parent=11 // pred_region
          %p148 = scmp.lt.s32.totalorder %s21, 0
          %s149 = scalar_select %p148, %s21, 0
          %s150 = smul.addr %s149, 2
          %s151 = scalar_lea.vmem %s1, %s150
        $region16: #{tpu_custom_call.1} parent=11 // pred_fallthru
          _
        // Predicated region
        $region17: #{tpu_custom_call.1} parent=11 // pred_check
          %p152 = pneg %p102
        $region18: #{tpu_custom_call.1} parent=11 // pred_check_branch
          %154 = sbr.rel (%p152) target = $region20
        $region19: #{tpu_custom_call.1} parent=11 // pred_region
          %p155 = scmp.lt.s32.totalorder %s21, 0
          %s156 = scalar_select %p155, %s21, 0
          %s157 = scalar_lea.vmem %s2, %s156
        $region20: #{tpu_custom_call.1} parent=11 // pred_fallthru
          _
      $region12: #{tpu_custom_call.1} parent=5 // pred_fallthru
        _
      %p158 = scmp.lt.s32.totalorder %s12, 2
      // Predicated region
      $region21: #{tpu_custom_call.1} parent=5 // pred_check
        %p159 = pneg %p158
      $region22: #{tpu_custom_call.1} parent=5 // pred_check_branch
        %161 = sbr.rel (%p159) target = $region24
      $region23: #{tpu_custom_call.1} parent=5 // pred_region
        // Predicated region
        $region25: #{tpu_custom_call.1} parent=23 // pred_check
          %p162 = pneg %p44
        $region26: #{tpu_custom_call.1} parent=23 // pred_check_branch
          %164 = sbr.rel (%p162) target = $region28
        $region27: #{tpu_custom_call.1} parent=23 // pred_region
          %p165 = scmp.lt.s32.totalorder %s20, 1
          %s166 = scalar_select %p165, %s20, 1
          %s167 = smul.addr %s166, 32
          %s168 = smul.addr %s167, 8
          %s169 = scalar_lea.vmem %s0, %s168
        $region28: #{tpu_custom_call.1} parent=23 // pred_fallthru
          _
      $region24: #{tpu_custom_call.1} parent=5 // pred_fallthru
        _
      %p170 = scmp.le.s32.totalorder 1, %s12
      %p171 = scmp.lt.s32.totalorder %s12, 3
      %p172 = pnand %p170, %p171
      %p173 = pneg %p172
      // Predicated region
      $region29: #{tpu_custom_call.1} parent=5 // pred_check
        _
      $region30: #{tpu_custom_call.1} parent=5 // pred_check_branch
        %175 = sbr.rel (%p172) target = $region32
      $region31: #{tpu_custom_call.1} parent=5 // pred_region
        %s176 = ssub.s32 %s12, 1
        %p177 = scmp.lt.s32.totalorder %s22, 1
        %s178 = scalar_select %p177, %s22, 1
        %s179 = smul.addr %s178, 32
        %s180 = smul.addr %s179, 8
        %s181 = scalar_lea.vmem %s0, %s180
        %p182 = pneg %p50
        %p183 = pneg %p47
        %p184 = scmp.lt.s32.totalorder %s21, 0
        %s185 = scalar_select %p184, %s21, 0
        %s186 = smul.addr %s185, 2
        %s187 = scalar_lea.vmem %s1, %s186
        %p188 = pneg %p76
        %p189 = pneg %p73
        %p190 = scmp.lt.s32.totalorder %s21, 0
        %s191 = scalar_select %p190, %s21, 0
        %s192 = scalar_lea.vmem %s2, %s191
        %p193 = pneg %p102
        %p194 = pneg %p99
        %p195 = pneg %p130
        %p196 = pneg %p127
        %s197 = sand.u32 %s117, 1
        %s198 = scalar_lea.sflag [#allocation3], %s197
        %s199 = sand.u32 %s117, 1
        %s200 = smul.addr %s199, 256
        %s201 = scalar_lea.vmem [#allocation2], %s200
        %p202 = scmp.lt.s32.totalorder %s22, 1
        %s203 = scalar_select %p202, %s22, 1
        %s204 = smul.addr %s203, 32
        %s205 = smul.addr %s204, 8
        %s206 = scalar_lea.vmem %s0, %s205
        %p207 = scmp.lt.s32.totalorder %s21, 0
        %s208 = scalar_select %p207, %s21, 0
        %s209 = smul.addr %s208, 2
        %s210 = scalar_lea.vmem %s1, %s209
        %p211 = scmp.lt.s32.totalorder %s21, 0
        %s212 = scalar_select %p211, %s21, 0
        %s213 = scalar_lea.vmem %s2, %s212
        %v215 = vld [vmem:[%s206] sm:$0xff]
        %v216 = vld [vmem:[%s206 + $0x8] sm:$0xff]
        %v217 = vld [vmem:[%s206 + $0x10] sm:$0xff]
        %v218 = vld [vmem:[%s206 + $0x18] sm:$0xff]
        %v219 = vld [vmem:[%s206 + $0x20] sm:$0xff]
        %v220 = vld [vmem:[%s206 + $0x28] sm:$0xff]
        %v221 = vld [vmem:[%s206 + $0x30] sm:$0xff]
        %v222 = vld [vmem:[%s206 + $0x38] sm:$0xff]
        %v223 = vld [vmem:[%s206 + $0x40] sm:$0xff]
        %v224 = vld [vmem:[%s206 + $0x48] sm:$0xff]
        %v225 = vld [vmem:[%s206 + $0x50] sm:$0xff]
        %v226 = vld [vmem:[%s206 + $0x58] sm:$0xff]
        %v227 = vld [vmem:[%s206 + $0x60] sm:$0xff]
        %v228 = vld [vmem:[%s206 + $0x68] sm:$0xff]
        %v229 = vld [vmem:[%s206 + $0x70] sm:$0xff]
        %v230 = vld [vmem:[%s206 + $0x78] sm:$0xff]
        %v231 = vld [vmem:[%s206 + $0x80] sm:$0xff]
        %v232 = vld [vmem:[%s206 + $0x88] sm:$0xff]
        %v233 = vld [vmem:[%s206 + $0x90] sm:$0xff]
        %v234 = vld [vmem:[%s206 + $0x98] sm:$0xff]
        %v235 = vld [vmem:[%s206 + $0xa0] sm:$0xff]
        %v236 = vld [vmem:[%s206 + $0xa8] sm:$0xff]
        %v237 = vld [vmem:[%s206 + $0xb0] sm:$0xff]
        %v238 = vld [vmem:[%s206 + $0xb8] sm:$0xff]
        %v239 = vld [vmem:[%s206 + $0xc0] sm:$0xff]
        %v240 = vld [vmem:[%s206 + $0xc8] sm:$0xff]
        %v241 = vld [vmem:[%s206 + $0xd0] sm:$0xff]
        %v242 = vld [vmem:[%s206 + $0xd8] sm:$0xff]
        %v243 = vld [vmem:[%s206 + $0xe0] sm:$0xff]
        %v244 = vld [vmem:[%s206 + $0xe8] sm:$0xff]
        %v245 = vld [vmem:[%s206 + $0xf0] sm:$0xff]
        %v246 = vld [vmem:[%s206 + $0xf8] sm:$0xff]
        %v247 = vpack.c.bf16 %v215, %v215
        %v248 = vpack.c.bf16 %v216, %v216
        %v249 = vpack.c.bf16 %v217, %v217
        %v250 = vpack.c.bf16 %v218, %v218
        %v251 = vpack.c.bf16 %v219, %v219
        %v252 = vpack.c.bf16 %v220, %v220
        %v253 = vpack.c.bf16 %v221, %v221
        %v254 = vpack.c.bf16 %v222, %v222
        %v255 = vpack.c.bf16 %v223, %v223
        %v256 = vpack.c.bf16 %v224, %v224
        %v257 = vpack.c.bf16 %v225, %v225
        %v258 = vpack.c.bf16 %v226, %v226
        %v259 = vpack.c.bf16 %v227, %v227
        %v260 = vpack.c.bf16 %v228, %v228
        %v261 = vpack.c.bf16 %v229, %v229
        %v262 = vpack.c.bf16 %v230, %v230
        %v263 = vpack.c.bf16 %v231, %v231
        %v264 = vpack.c.bf16 %v232, %v232
        %v265 = vpack.c.bf16 %v233, %v233
        %v266 = vpack.c.bf16 %v234, %v234
        %v267 = vpack.c.bf16 %v235, %v235
        %v268 = vpack.c.bf16 %v236, %v236
        %v269 = vpack.c.bf16 %v237, %v237
        %v270 = vpack.c.bf16 %v238, %v238
        %v271 = vpack.c.bf16 %v239, %v239
        %v272 = vpack.c.bf16 %v240, %v240
        %v273 = vpack.c.bf16 %v241, %v241
        %v274 = vpack.c.bf16 %v242, %v242
        %v275 = vpack.c.bf16 %v243, %v243
        %v276 = vpack.c.bf16 %v244, %v244
        %v277 = vpack.c.bf16 %v245, %v245
        %v278 = vpack.c.bf16 %v246, %v246
        %v311 = vunpack.c.l.b16 %v247
        %v312 = vunpack.c.l.b16 %v248
        %v313 = vunpack.c.l.b16 %v249
        %v314 = vunpack.c.l.b16 %v250
        %v315 = vunpack.c.l.b16 %v251
        %v316 = vunpack.c.l.b16 %v252
        %v317 = vunpack.c.l.b16 %v253
        %v318 = vunpack.c.l.b16 %v254
        %v319 = vunpack.c.l.b16 %v255
        %v320 = vunpack.c.l.b16 %v256
        %v321 = vunpack.c.l.b16 %v257
        %v322 = vunpack.c.l.b16 %v258
        %v323 = vunpack.c.l.b16 %v259
        %v324 = vunpack.c.l.b16 %v260
        %v325 = vunpack.c.l.b16 %v261
        %v326 = vunpack.c.l.b16 %v262
        %v327 = vunpack.c.l.b16 %v263
        %v328 = vunpack.c.l.b16 %v264
        %v329 = vunpack.c.l.b16 %v265
        %v330 = vunpack.c.l.b16 %v266
        %v331 = vunpack.c.l.b16 %v267
        %v332 = vunpack.c.l.b16 %v268
        %v333 = vunpack.c.l.b16 %v269
        %v334 = vunpack.c.l.b16 %v270
        %v335 = vunpack.c.l.b16 %v271
        %v336 = vunpack.c.l.b16 %v272
        %v337 = vunpack.c.l.b16 %v273
        %v338 = vunpack.c.l.b16 %v274
        %v339 = vunpack.c.l.b16 %v275
        %v340 = vunpack.c.l.b16 %v276
        %v341 = vunpack.c.l.b16 %v277
        %v342 = vunpack.c.l.b16 %v278
        %v343 = vpack.c.b16 %v312, %v311
        %v344 = vpack.c.b16 %v314, %v313
        %v345 = vpack.c.b16 %v316, %v315
        %v346 = vpack.c.b16 %v318, %v317
        %v347 = vpack.c.b16 %v320, %v319
        %v348 = vpack.c.b16 %v322, %v321
        %v349 = vpack.c.b16 %v324, %v323
        %v350 = vpack.c.b16 %v326, %v325
        %v351 = vpack.c.b16 %v328, %v327
        %v352 = vpack.c.b16 %v330, %v329
        %v353 = vpack.c.b16 %v332, %v331
        %v354 = vpack.c.b16 %v334, %v333
        %v355 = vpack.c.b16 %v336, %v335
        %v356 = vpack.c.b16 %v338, %v337
        %v357 = vpack.c.b16 %v340, %v339
        %v358 = vpack.c.b16 %v342, %v341
        %v360 = vshrl.u32 0, 16
        %v362 = vrot.slane %v360, 7
        %v363 = vshll.u32 0, 16
        %v365 = vor.u32 %v362, %v363
        %v367 = vshrl.u32 %v343, 16
        %v369 = vrot.slane %v367, 7
        %v370 = vshll.u32 %v343, 16
        %v372 = vor.u32 %v369, %v370
        %v374 = vshrl.u32 %v344, 16
        %v376 = vrot.slane %v374, 7
        %v377 = vshll.u32 %v344, 16
        %v379 = vor.u32 %v376, %v377
        %v381 = vshrl.u32 %v345, 16
        %v383 = vrot.slane %v381, 7
        %v384 = vshll.u32 %v345, 16
        %v386 = vor.u32 %v383, %v384
        %v388 = vshrl.u32 %v346, 16
        %v390 = vrot.slane %v388, 7
        %v391 = vshll.u32 %v346, 16
        %v393 = vor.u32 %v390, %v391
        %v395 = vshrl.u32 %v347, 16
        %v397 = vrot.slane %v395, 7
        %v398 = vshll.u32 %v347, 16
        %v400 = vor.u32 %v397, %v398
        %v402 = vshrl.u32 %v348, 16
        %v404 = vrot.slane %v402, 7
        %v405 = vshll.u32 %v348, 16
        %v407 = vor.u32 %v404, %v405
        %v409 = vshrl.u32 %v349, 16
        %v411 = vrot.slane %v409, 7
        %v412 = vshll.u32 %v349, 16
        %v414 = vor.u32 %v411, %v412
        %v416 = vshrl.u32 %v350, 16
        %v418 = vrot.slane %v416, 7
        %v419 = vshll.u32 %v350, 16
        %v421 = vor.u32 %v418, %v419
        %v423 = vshrl.u32 %v351, 16
        %v425 = vrot.slane %v423, 7
        %v426 = vshll.u32 %v351, 16
        %v428 = vor.u32 %v425, %v426
        %v430 = vshrl.u32 %v352, 16
        %v432 = vrot.slane %v430, 7
        %v433 = vshll.u32 %v352, 16
        %v435 = vor.u32 %v432, %v433
        %v437 = vshrl.u32 %v353, 16
        %v439 = vrot.slane %v437, 7
        %v440 = vshll.u32 %v353, 16
        %v442 = vor.u32 %v439, %v440
        %v444 = vshrl.u32 %v354, 16
        %v446 = vrot.slane %v444, 7
        %v447 = vshll.u32 %v354, 16
        %v449 = vor.u32 %v446, %v447
        %v451 = vshrl.u32 %v355, 16
        %v453 = vrot.slane %v451, 7
        %v454 = vshll.u32 %v355, 16
        %v456 = vor.u32 %v453, %v454
        %v458 = vshrl.u32 %v356, 16
        %v460 = vrot.slane %v458, 7
        %v461 = vshll.u32 %v356, 16
        %v463 = vor.u32 %v460, %v461
        %v465 = vshrl.u32 %v357, 16
        %v467 = vrot.slane %v465, 7
        %v468 = vshll.u32 %v357, 16
        %v470 = vor.u32 %v467, %v468
        %v472 = vshrl.u32 %v358, 16
        %v474 = vrot.slane %v472, 7
        %v475 = vshll.u32 %v358, 16
        %v477 = vor.u32 %v474, %v475
        %vm512 = vcmask 1040384
        %vm513 = vsmask.f32 256
        %vm514 = vmand %vm512, %vm513
        %v515 = vsel %vm514, 0, %v365
        %v516 = vsel %vm514, 0, %v372
        %v517 = vsel %vm514, 0, %v379
        %v518 = vsel %vm514, 0, %v386
        %v519 = vsel %vm514, 0, %v393
        %v520 = vsel %vm514, 0, %v400
        %v521 = vsel %vm514, 0, %v407
        %v522 = vsel %vm514, 0, %v414
        %v523 = vsel %vm514, 0, %v421
        %v524 = vsel %vm514, 0, %v428
        %v525 = vsel %vm514, 0, %v435
        %v526 = vsel %vm514, 0, %v442
        %v527 = vsel %vm514, 0, %v449
        %v528 = vsel %vm514, 0, %v456
        %v529 = vsel %vm514, 0, %v463
        %v530 = vsel %vm514, 0, %v470
        %v531 = vsel %vm514, 0, %v477
        %v532 = vsel %vm514, %v362, 0
        %v533 = vsel %vm514, %v369, 0
        %v534 = vsel %vm514, %v376, 0
        %v535 = vsel %vm514, %v383, 0
        %v536 = vsel %vm514, %v390, 0
        %v537 = vsel %vm514, %v397, 0
        %v538 = vsel %vm514, %v404, 0
        %v539 = vsel %vm514, %v411, 0
        %v540 = vsel %vm514, %v418, 0
        %v541 = vsel %vm514, %v425, 0
        %v542 = vsel %vm514, %v432, 0
        %v543 = vsel %vm514, %v439, 0
        %v544 = vsel %vm514, %v446, 0
        %v545 = vsel %vm514, %v453, 0
        %v546 = vsel %vm514, %v460, 0
        %v547 = vsel %vm514, %v467, 0
        %v548 = vsel %vm514, %v474, 0
        %vm549 = vsmask.f32 7424
        %v551 = vshrl.u32 %v515, 16
        %v553 = vshll.u32 %v515, 16
        %v555 = vrot.slane %v553, 1
        %v556 = vor.u32 %v551, %v555
        %v558 = vshll.u32 %v532, 16
        %v560 = vrot.slane %v558, 1
        %v561 = vsel %vm549, %v556, %v560
        %v563 = vshrl.u32 %v516, 16
        %v565 = vshll.u32 %v516, 16
        %v567 = vrot.slane %v565, 1
        %v568 = vor.u32 %v563, %v567
        %v570 = vshll.u32 %v533, 16
        %v572 = vrot.slane %v570, 1
        %v573 = vsel %vm549, %v568, %v572
        %v575 = vshrl.u32 %v517, 16
        %v577 = vshll.u32 %v517, 16
        %v579 = vrot.slane %v577, 1
        %v580 = vor.u32 %v575, %v579
        %v582 = vshll.u32 %v534, 16
        %v584 = vrot.slane %v582, 1
        %v585 = vsel %vm549, %v580, %v584
        %v587 = vshrl.u32 %v518, 16
        %v589 = vshll.u32 %v518, 16
        %v591 = vrot.slane %v589, 1
        %v592 = vor.u32 %v587, %v591
        %v594 = vshll.u32 %v535, 16
        %v596 = vrot.slane %v594, 1
        %v597 = vsel %vm549, %v592, %v596
        %v599 = vshrl.u32 %v519, 16
        %v601 = vshll.u32 %v519, 16
        %v603 = vrot.slane %v601, 1
        %v604 = vor.u32 %v599, %v603
        %v606 = vshll.u32 %v536, 16
        %v608 = vrot.slane %v606, 1
        %v609 = vsel %vm549, %v604, %v608
        %v611 = vshrl.u32 %v520, 16
        %v613 = vshll.u32 %v520, 16
        %v615 = vrot.slane %v613, 1
        %v616 = vor.u32 %v611, %v615
        %v618 = vshll.u32 %v537, 16
        %v620 = vrot.slane %v618, 1
        %v621 = vsel %vm549, %v616, %v620
        %v623 = vshrl.u32 %v521, 16
        %v625 = vshll.u32 %v521, 16
        %v627 = vrot.slane %v625, 1
        %v628 = vor.u32 %v623, %v627
        %v630 = vshll.u32 %v538, 16
        %v632 = vrot.slane %v630, 1
        %v633 = vsel %vm549, %v628, %v632
        %v635 = vshrl.u32 %v522, 16
        %v637 = vshll.u32 %v522, 16
        %v639 = vrot.slane %v637, 1
        %v640 = vor.u32 %v635, %v639
        %v642 = vshll.u32 %v539, 16
        %v644 = vrot.slane %v642, 1
        %v645 = vsel %vm549, %v640, %v644
        %v647 = vshrl.u32 %v523, 16
        %v649 = vshll.u32 %v523, 16
        %v651 = vrot.slane %v649, 1
        %v652 = vor.u32 %v647, %v651
        %v654 = vshll.u32 %v540, 16
        %v656 = vrot.slane %v654, 1
        %v657 = vsel %vm549, %v652, %v656
        %v659 = vshrl.u32 %v524, 16
        %v661 = vshll.u32 %v524, 16
        %v663 = vrot.slane %v661, 1
        %v664 = vor.u32 %v659, %v663
        %v666 = vshll.u32 %v541, 16
        %v668 = vrot.slane %v666, 1
        %v669 = vsel %vm549, %v664, %v668
        %v671 = vshrl.u32 %v525, 16
        %v673 = vshll.u32 %v525, 16
        %v675 = vrot.slane %v673, 1
        %v676 = vor.u32 %v671, %v675
        %v678 = vshll.u32 %v542, 16
        %v680 = vrot.slane %v678, 1
        %v681 = vsel %vm549, %v676, %v680
        %v683 = vshrl.u32 %v526, 16
        %v685 = vshll.u32 %v526, 16
        %v687 = vrot.slane %v685, 1
        %v688 = vor.u32 %v683, %v687
        %v690 = vshll.u32 %v543, 16
        %v692 = vrot.slane %v690, 1
        %v693 = vsel %vm549, %v688, %v692
        %v695 = vshrl.u32 %v527, 16
        %v697 = vshll.u32 %v527, 16
        %v699 = vrot.slane %v697, 1
        %v700 = vor.u32 %v695, %v699
        %v702 = vshll.u32 %v544, 16
        %v704 = vrot.slane %v702, 1
        %v705 = vsel %vm549, %v700, %v704
        %v707 = vshrl.u32 %v528, 16
        %v709 = vshll.u32 %v528, 16
        %v711 = vrot.slane %v709, 1
        %v712 = vor.u32 %v707, %v711
        %v714 = vshll.u32 %v545, 16
        %v716 = vrot.slane %v714, 1
        %v717 = vsel %vm549, %v712, %v716
        %v719 = vshrl.u32 %v529, 16
        %v721 = vshll.u32 %v529, 16
        %v723 = vrot.slane %v721, 1
        %v724 = vor.u32 %v719, %v723
        %v726 = vshll.u32 %v546, 16
        %v728 = vrot.slane %v726, 1
        %v729 = vsel %vm549, %v724, %v728
        %v731 = vshrl.u32 %v530, 16
        %v733 = vshll.u32 %v530, 16
        %v735 = vrot.slane %v733, 1
        %v736 = vor.u32 %v731, %v735
        %v738 = vshll.u32 %v547, 16
        %v740 = vrot.slane %v738, 1
        %v741 = vsel %vm549, %v736, %v740
        %742 = vrot.lane.b32.xlu0 %v561, 3
        %v743 = vpop.permute.xlu0 %742
        %744 = vrot.lane.b32.xlu0 %v573, 3
        %v745 = vpop.permute.xlu0 %744
        %746 = vrot.lane.b32.xlu0 %v585, 3
        %v747 = vpop.permute.xlu0 %746
        %748 = vrot.lane.b32.xlu0 %v597, 3
        %v749 = vpop.permute.xlu0 %748
        %750 = vrot.lane.b32.xlu0 %v609, 3
        %v751 = vpop.permute.xlu0 %750
        %752 = vrot.lane.b32.xlu0 %v621, 3
        %v753 = vpop.permute.xlu0 %752
        %754 = vrot.lane.b32.xlu0 %v633, 3
        %v755 = vpop.permute.xlu0 %754
        %756 = vrot.lane.b32.xlu0 %v645, 3
        %v757 = vpop.permute.xlu0 %756
        %758 = vrot.lane.b32.xlu0 %v657, 3
        %v759 = vpop.permute.xlu0 %758
        %760 = vrot.lane.b32.xlu0 %v669, 3
        %v761 = vpop.permute.xlu0 %760
        %762 = vrot.lane.b32.xlu0 %v681, 3
        %v763 = vpop.permute.xlu0 %762
        %764 = vrot.lane.b32.xlu0 %v693, 3
        %v765 = vpop.permute.xlu0 %764
        %766 = vrot.lane.b32.xlu0 %v705, 3
        %v767 = vpop.permute.xlu0 %766
        %768 = vrot.lane.b32.xlu0 %v717, 3
        %v769 = vpop.permute.xlu0 %768
        %770 = vrot.lane.b32.xlu0 %v729, 3
        %v771 = vpop.permute.xlu0 %770
        %772 = vrot.lane.b32.xlu0 %v741, 3
        %v773 = vpop.permute.xlu0 %772
        %vm806 = vcmask 1046528
        %v807 = vrot.slane %v515, 1
        %v808 = vrot.slane %v532, 1
        %v809 = vsel %vm806, %v807, %v808
        %v810 = vrot.slane %v516, 1
        %v811 = vrot.slane %v533, 1
        %v812 = vsel %vm806, %v810, %v811
        %v813 = vrot.slane %v517, 1
        %v814 = vrot.slane %v534, 1
        %v815 = vsel %vm806, %v813, %v814
        %v816 = vrot.slane %v518, 1
        %v817 = vrot.slane %v535, 1
        %v818 = vsel %vm806, %v816, %v817
        %v819 = vrot.slane %v519, 1
        %v820 = vrot.slane %v536, 1
        %v821 = vsel %vm806, %v819, %v820
        %v822 = vrot.slane %v520, 1
        %v823 = vrot.slane %v537, 1
        %v824 = vsel %vm806, %v822, %v823
        %v825 = vrot.slane %v521, 1
        %v826 = vrot.slane %v538, 1
        %v827 = vsel %vm806, %v825, %v826
        %v828 = vrot.slane %v522, 1
        %v829 = vrot.slane %v539, 1
        %v830 = vsel %vm806, %v828, %v829
        %v831 = vrot.slane %v523, 1
        %v832 = vrot.slane %v540, 1
        %v833 = vsel %vm806, %v831, %v832
        %v834 = vrot.slane %v524, 1
        %v835 = vrot.slane %v541, 1
        %v836 = vsel %vm806, %v834, %v835
        %v837 = vrot.slane %v525, 1
        %v838 = vrot.slane %v542, 1
        %v839 = vsel %vm806, %v837, %v838
        %v840 = vrot.slane %v526, 1
        %v841 = vrot.slane %v543, 1
        %v842 = vsel %vm806, %v840, %v841
        %v843 = vrot.slane %v527, 1
        %v844 = vrot.slane %v544, 1
        %v845 = vsel %vm806, %v843, %v844
        %v846 = vrot.slane %v528, 1
        %v847 = vrot.slane %v545, 1
        %v848 = vsel %vm806, %v846, %v847
        %v849 = vrot.slane %v529, 1
        %v850 = vrot.slane %v546, 1
        %v851 = vsel %vm806, %v849, %v850
        %v852 = vrot.slane %v530, 1
        %v853 = vrot.slane %v547, 1
        %v854 = vsel %vm806, %v852, %v853
        %855 = vrot.lane.b32.xlu0 %v809, 6
        %v856 = vpop.permute.xlu0 %855
        %857 = vrot.lane.b32.xlu0 %v812, 6
        %v858 = vpop.permute.xlu0 %857
        %859 = vrot.lane.b32.xlu0 %v815, 6
        %v860 = vpop.permute.xlu0 %859
        %861 = vrot.lane.b32.xlu0 %v818, 6
        %v862 = vpop.permute.xlu0 %861
        %863 = vrot.lane.b32.xlu0 %v821, 6
        %v864 = vpop.permute.xlu0 %863
        %865 = vrot.lane.b32.xlu0 %v824, 6
        %v866 = vpop.permute.xlu0 %865
        %867 = vrot.lane.b32.xlu0 %v827, 6
        %v868 = vpop.permute.xlu0 %867
        %869 = vrot.lane.b32.xlu0 %v830, 6
        %v870 = vpop.permute.xlu0 %869
        %871 = vrot.lane.b32.xlu0 %v833, 6
        %v872 = vpop.permute.xlu0 %871
        %873 = vrot.lane.b32.xlu0 %v836, 6
        %v874 = vpop.permute.xlu0 %873
        %875 = vrot.lane.b32.xlu0 %v839, 6
        %v876 = vpop.permute.xlu0 %875
        %877 = vrot.lane.b32.xlu0 %v842, 6
        %v878 = vpop.permute.xlu0 %877
        %879 = vrot.lane.b32.xlu0 %v845, 6
        %v880 = vpop.permute.xlu0 %879
        %881 = vrot.lane.b32.xlu0 %v848, 6
        %v882 = vpop.permute.xlu0 %881
        %883 = vrot.lane.b32.xlu0 %v851, 6
        %v884 = vpop.permute.xlu0 %883
        %885 = vrot.lane.b32.xlu0 %v854, 6
        %v886 = vpop.permute.xlu0 %885
        %888 = vrot.lane.b32.xlu0 %v516, 9
        %v889 = vpop.permute.xlu0 %888
        %890 = vrot.lane.b32.xlu0 %v517, 9
        %v891 = vpop.permute.xlu0 %890
        %892 = vrot.lane.b32.xlu0 %v518, 9
        %v893 = vpop.permute.xlu0 %892
        %894 = vrot.lane.b32.xlu0 %v519, 9
        %v895 = vpop.permute.xlu0 %894
        %896 = vrot.lane.b32.xlu0 %v520, 9
        %v897 = vpop.permute.xlu0 %896
        %898 = vrot.lane.b32.xlu0 %v521, 9
        %v899 = vpop.permute.xlu0 %898
        %900 = vrot.lane.b32.xlu0 %v522, 9
        %v901 = vpop.permute.xlu0 %900
        %902 = vrot.lane.b32.xlu0 %v523, 9
        %v903 = vpop.permute.xlu0 %902
        %904 = vrot.lane.b32.xlu0 %v524, 9
        %v905 = vpop.permute.xlu0 %904
        %906 = vrot.lane.b32.xlu0 %v525, 9
        %v907 = vpop.permute.xlu0 %906
        %908 = vrot.lane.b32.xlu0 %v526, 9
        %v909 = vpop.permute.xlu0 %908
        %910 = vrot.lane.b32.xlu0 %v527, 9
        %v911 = vpop.permute.xlu0 %910
        %912 = vrot.lane.b32.xlu0 %v528, 9
        %v913 = vpop.permute.xlu0 %912
        %914 = vrot.lane.b32.xlu0 %v529, 9
        %v915 = vpop.permute.xlu0 %914
        %916 = vrot.lane.b32.xlu0 %v530, 9
        %v917 = vpop.permute.xlu0 %916
        %918 = vrot.lane.b32.xlu0 %v531, 9
        %v919 = vpop.permute.xlu0 %918
        %v921 = vshrl.u32 %v531, 16
        %v923 = vshll.u32 %v531, 16
        %v925 = vrot.slane %v923, 1
        %v926 = vor.u32 %v921, %v925
        %v928 = vshll.u32 %v548, 16
        %v930 = vrot.slane %v928, 1
        %v931 = vsel %vm549, %v926, %v930
        %932 = vrot.lane.b32.xlu0 %v573, 12
        %v933 = vpop.permute.xlu0 %932
        %934 = vrot.lane.b32.xlu0 %v585, 12
        %v935 = vpop.permute.xlu0 %934
        %936 = vrot.lane.b32.xlu0 %v597, 12
        %v937 = vpop.permute.xlu0 %936
        %938 = vrot.lane.b32.xlu0 %v609, 12
        %v939 = vpop.permute.xlu0 %938
        %940 = vrot.lane.b32.xlu0 %v621, 12
        %v941 = vpop.permute.xlu0 %940
        %942 = vrot.lane.b32.xlu0 %v633, 12
        %v943 = vpop.permute.xlu0 %942
        %944 = vrot.lane.b32.xlu0 %v645, 12
        %v945 = vpop.permute.xlu0 %944
        %946 = vrot.lane.b32.xlu0 %v657, 12
        %v947 = vpop.permute.xlu0 %946
        %948 = vrot.lane.b32.xlu0 %v669, 12
        %v949 = vpop.permute.xlu0 %948
        %950 = vrot.lane.b32.xlu0 %v681, 12
        %v951 = vpop.permute.xlu0 %950
        %952 = vrot.lane.b32.xlu0 %v693, 12
        %v953 = vpop.permute.xlu0 %952
        %954 = vrot.lane.b32.xlu0 %v705, 12
        %v955 = vpop.permute.xlu0 %954
        %956 = vrot.lane.b32.xlu0 %v717, 12
        %v957 = vpop.permute.xlu0 %956
        %958 = vrot.lane.b32.xlu0 %v729, 12
        %v959 = vpop.permute.xlu0 %958
        %960 = vrot.lane.b32.xlu0 %v741, 12
        %v961 = vpop.permute.xlu0 %960
        %962 = vrot.lane.b32.xlu0 %v931, 12
        %v963 = vpop.permute.xlu0 %962
        %v965 = vrot.slane %v531, 1
        %v966 = vrot.slane %v548, 1
        %v967 = vsel %vm806, %v965, %v966
        %968 = vrot.lane.b32.xlu0 %v812, 15
        %v969 = vpop.permute.xlu0 %968
        %970 = vrot.lane.b32.xlu0 %v815, 15
        %v971 = vpop.permute.xlu0 %970
        %972 = vrot.lane.b32.xlu0 %v818, 15
        %v973 = vpop.permute.xlu0 %972
        %974 = vrot.lane.b32.xlu0 %v821, 15
        %v975 = vpop.permute.xlu0 %974
        %976 = vrot.lane.b32.xlu0 %v824, 15
        %v977 = vpop.permute.xlu0 %976
        %978 = vrot.lane.b32.xlu0 %v827, 15
        %v979 = vpop.permute.xlu0 %978
        %980 = vrot.lane.b32.xlu0 %v830, 15
        %v981 = vpop.permute.xlu0 %980
        %982 = vrot.lane.b32.xlu0 %v833, 15
        %v983 = vpop.permute.xlu0 %982
        %984 = vrot.lane.b32.xlu0 %v836, 15
        %v985 = vpop.permute.xlu0 %984
        %986 = vrot.lane.b32.xlu0 %v839, 15
        %v987 = vpop.permute.xlu0 %986
        %988 = vrot.lane.b32.xlu0 %v842, 15
        %v989 = vpop.permute.xlu0 %988
        %990 = vrot.lane.b32.xlu0 %v845, 15
        %v991 = vpop.permute.xlu0 %990
        %992 = vrot.lane.b32.xlu0 %v848, 15
        %v993 = vpop.permute.xlu0 %992
        %994 = vrot.lane.b32.xlu0 %v851, 15
        %v995 = vpop.permute.xlu0 %994
        %996 = vrot.lane.b32.xlu0 %v854, 15
        %v997 = vpop.permute.xlu0 %996
        %998 = vrot.lane.b32.xlu0 %v967, 15
        %v999 = vpop.permute.xlu0 %998
        %1000 = vrot.lane.b32.xlu0 %v517, 18
        %v1001 = vpop.permute.xlu0 %1000
        %1002 = vrot.lane.b32.xlu0 %v518, 18
        %v1003 = vpop.permute.xlu0 %1002
        %1004 = vrot.lane.b32.xlu0 %v519, 18
        %v1005 = vpop.permute.xlu0 %1004
        %1006 = vrot.lane.b32.xlu0 %v520, 18
        %v1007 = vpop.permute.xlu0 %1006
        %1008 = vrot.lane.b32.xlu0 %v521, 18
        %v1009 = vpop.permute.xlu0 %1008
        %1010 = vrot.lane.b32.xlu0 %v522, 18
        %v1011 = vpop.permute.xlu0 %1010
        %1012 = vrot.lane.b32.xlu0 %v523, 18
        %v1013 = vpop.permute.xlu0 %1012
        %1014 = vrot.lane.b32.xlu0 %v524, 18
        %v1015 = vpop.permute.xlu0 %1014
        %1016 = vrot.lane.b32.xlu0 %v525, 18
        %v1017 = vpop.permute.xlu0 %1016
        %1018 = vrot.lane.b32.xlu0 %v526, 18
        %v1019 = vpop.permute.xlu0 %1018
        %1020 = vrot.lane.b32.xlu0 %v527, 18
        %v1021 = vpop.permute.xlu0 %1020
        %1022 = vrot.lane.b32.xlu0 %v528, 18
        %v1023 = vpop.permute.xlu0 %1022
        %1024 = vrot.lane.b32.xlu0 %v529, 18
        %v1025 = vpop.permute.xlu0 %1024
        %1026 = vrot.lane.b32.xlu0 %v530, 18
        %v1027 = vpop.permute.xlu0 %1026
        %1028 = vrot.lane.b32.xlu0 %v531, 18
        %v1029 = vpop.permute.xlu0 %1028
        %1030 = vrot.lane.b32.xlu0 %v515, 18
        %v1031 = vpop.permute.xlu0 %1030
        %1032 = vrot.lane.b32.xlu0 %v585, 21
        %v1033 = vpop.permute.xlu0 %1032
        %1034 = vrot.lane.b32.xlu0 %v597, 21
        %v1035 = vpop.permute.xlu0 %1034
        %1036 = vrot.lane.b32.xlu0 %v609, 21
        %v1037 = vpop.permute.xlu0 %1036
        %1038 = vrot.lane.b32.xlu0 %v621, 21
        %v1039 = vpop.permute.xlu0 %1038
        %1040 = vrot.lane.b32.xlu0 %v633, 21
        %v1041 = vpop.permute.xlu0 %1040
        %1042 = vrot.lane.b32.xlu0 %v645, 21
        %v1043 = vpop.permute.xlu0 %1042
        %1044 = vrot.lane.b32.xlu0 %v657, 21
        %v1045 = vpop.permute.xlu0 %1044
        %1046 = vrot.lane.b32.xlu0 %v669, 21
        %v1047 = vpop.permute.xlu0 %1046
        %1048 = vrot.lane.b32.xlu0 %v681, 21
        %v1049 = vpop.permute.xlu0 %1048
        %1050 = vrot.lane.b32.xlu0 %v693, 21
        %v1051 = vpop.permute.xlu0 %1050
        %1052 = vrot.lane.b32.xlu0 %v705, 21
        %v1053 = vpop.permute.xlu0 %1052
        %1054 = vrot.lane.b32.xlu0 %v717, 21
        %v1055 = vpop.permute.xlu0 %1054
        %1056 = vrot.lane.b32.xlu0 %v729, 21
        %v1057 = vpop.permute.xlu0 %1056
        %1058 = vrot.lane.b32.xlu0 %v741, 21
        %v1059 = vpop.permute.xlu0 %1058
        %1060 = vrot.lane.b32.xlu0 %v931, 21
        %v1061 = vpop.permute.xlu0 %1060
        %1062 = vrot.lane.b32.xlu0 %v561, 21
        %v1063 = vpop.permute.xlu0 %1062
        %1064 = vrot.lane.b32.xlu0 %v815, 24
        %v1065 = vpop.permute.xlu0 %1064
        %1066 = vrot.lane.b32.xlu0 %v818, 24
        %v1067 = vpop.permute.xlu0 %1066
        %1068 = vrot.lane.b32.xlu0 %v821, 24
        %v1069 = vpop.permute.xlu0 %1068
        %1070 = vrot.lane.b32.xlu0 %v824, 24
        %v1071 = vpop.permute.xlu0 %1070
        %1072 = vrot.lane.b32.xlu0 %v827, 24
        %v1073 = vpop.permute.xlu0 %1072
        %1074 = vrot.lane.b32.xlu0 %v830, 24
        %v1075 = vpop.permute.xlu0 %1074
        %1076 = vrot.lane.b32.xlu0 %v833, 24
        %v1077 = vpop.permute.xlu0 %1076
        %1078 = vrot.lane.b32.xlu0 %v836, 24
        %v1079 = vpop.permute.xlu0 %1078
        %1080 = vrot.lane.b32.xlu0 %v839, 24
        %v1081 = vpop.permute.xlu0 %1080
        %1082 = vrot.lane.b32.xlu0 %v842, 24
        %v1083 = vpop.permute.xlu0 %1082
        %1084 = vrot.lane.b32.xlu0 %v845, 24
        %v1085 = vpop.permute.xlu0 %1084
        %1086 = vrot.lane.b32.xlu0 %v848, 24
        %v1087 = vpop.permute.xlu0 %1086
        %1088 = vrot.lane.b32.xlu0 %v851, 24
        %v1089 = vpop.permute.xlu0 %1088
        %1090 = vrot.lane.b32.xlu0 %v854, 24
        %v1091 = vpop.permute.xlu0 %1090
        %1092 = vrot.lane.b32.xlu0 %v967, 24
        %v1093 = vpop.permute.xlu0 %1092
        %1094 = vrot.lane.b32.xlu0 %v809, 24
        %v1095 = vpop.permute.xlu0 %1094
        %vm1096 = vcmask 23552
        %v1098 = vsel %vm1096, %v515, %v743
        %v1100 = vsel %vm1096, %v516, %v745
        %v1102 = vsel %vm1096, %v517, %v747
        %v1104 = vsel %vm1096, %v518, %v749
        %v1106 = vsel %vm1096, %v519, %v751
        %v1108 = vsel %vm1096, %v520, %v753
        %v1110 = vsel %vm1096, %v521, %v755
        %v1112 = vsel %vm1096, %v522, %v757
        %v1114 = vsel %vm1096, %v523, %v759
        %v1116 = vsel %vm1096, %v524, %v761
        %v1118 = vsel %vm1096, %v525, %v763
        %v1120 = vsel %vm1096, %v526, %v765
        %v1122 = vsel %vm1096, %v527, %v767
        %v1124 = vsel %vm1096, %v528, %v769
        %v1126 = vsel %vm1096, %v529, %v771
        %v1128 = vsel %vm1096, %v530, %v773
        %vm1129 = vcmask 48128
        %v1131 = vsel %vm1129, %v1098, %v856
        %v1133 = vsel %vm1129, %v1100, %v858
        %v1135 = vsel %vm1129, %v1102, %v860
        %v1137 = vsel %vm1129, %v1104, %v862
        %v1139 = vsel %vm1129, %v1106, %v864
        %v1141 = vsel %vm1129, %v1108, %v866
        %v1143 = vsel %vm1129, %v1110, %v868
        %v1145 = vsel %vm1129, %v1112, %v870
        %v1147 = vsel %vm1129, %v1114, %v872
        %v1149 = vsel %vm1129, %v1116, %v874
        %v1151 = vsel %vm1129, %v1118, %v876
        %v1153 = vsel %vm1129, %v1120, %v878
        %v1155 = vsel %vm1129, %v1122, %v880
        %v1157 = vsel %vm1129, %v1124, %v882
        %v1159 = vsel %vm1129, %v1126, %v884
        %v1161 = vsel %vm1129, %v1128, %v886
        %vm1162 = vcmask 72704
        %v1164 = vsel %vm1162, %v1131, %v889
        %v1166 = vsel %vm1162, %v1133, %v891
        %v1168 = vsel %vm1162, %v1135, %v893
        %v1170 = vsel %vm1162, %v1137, %v895
        %v1172 = vsel %vm1162, %v1139, %v897
        %v1174 = vsel %vm1162, %v1141, %v899
        %v1176 = vsel %vm1162, %v1143, %v901
        %v1178 = vsel %vm1162, %v1145, %v903
        %v1180 = vsel %vm1162, %v1147, %v905
        %v1182 = vsel %vm1162, %v1149, %v907
        %v1184 = vsel %vm1162, %v1151, %v909
        %v1186 = vsel %vm1162, %v1153, %v911
        %v1188 = vsel %vm1162, %v1155, %v913
        %v1190 = vsel %vm1162, %v1157, %v915
        %v1192 = vsel %vm1162, %v1159, %v917
        %v1194 = vsel %vm1162, %v1161, %v919
        %vm1195 = vcmask 97280
        %v1197 = vsel %vm1195, %v1164, %v933
        %v1199 = vsel %vm1195, %v1166, %v935
        %v1201 = vsel %vm1195, %v1168, %v937
        %v1203 = vsel %vm1195, %v1170, %v939
        %v1205 = vsel %vm1195, %v1172, %v941
        %v1207 = vsel %vm1195, %v1174, %v943
        %v1209 = vsel %vm1195, %v1176, %v945
        %v1211 = vsel %vm1195, %v1178, %v947
        %v1213 = vsel %vm1195, %v1180, %v949
        %v1215 = vsel %vm1195, %v1182, %v951
        %v1217 = vsel %vm1195, %v1184, %v953
        %v1219 = vsel %vm1195, %v1186, %v955
        %v1221 = vsel %vm1195, %v1188, %v957
        %v1223 = vsel %vm1195, %v1190, %v959
        %v1225 = vsel %vm1195, %v1192, %v961
        %v1227 = vsel %vm1195, %v1194, %v963
        %vm1228 = vcmask 121856
        %v1230 = vsel %vm1228, %v1197, %v969
        %v1232 = vsel %vm1228, %v1199, %v971
        %v1234 = vsel %vm1228, %v1201, %v973
        %v1236 = vsel %vm1228, %v1203, %v975
        %v1238 = vsel %vm1228, %v1205, %v977
        %v1240 = vsel %vm1228, %v1207, %v979
        %v1242 = vsel %vm1228, %v1209, %v981
        %v1244 = vsel %vm1228, %v1211, %v983
        %v1246 = vsel %vm1228, %v1213, %v985
        %v1248 = vsel %vm1228, %v1215, %v987
        %v1250 = vsel %vm1228, %v1217, %v989
        %v1252 = vsel %vm1228, %v1219, %v991
        %v1254 = vsel %vm1228, %v1221, %v993
        %v1256 = vsel %vm1228, %v1223, %v995
        %v1258 = vsel %vm1228, %v1225, %v997
        %v1260 = vsel %vm1228, %v1227, %v999
        %vm1261 = vcmask 146432
        %v1263 = vsel %vm1261, %v1230, %v1001
        %v1265 = vsel %vm1261, %v1232, %v1003
        %v1267 = vsel %vm1261, %v1234, %v1005
        %v1269 = vsel %vm1261, %v1236, %v1007
        %v1271 = vsel %vm1261, %v1238, %v1009
        %v1273 = vsel %vm1261, %v1240, %v1011
        %v1275 = vsel %vm1261, %v1242, %v1013
        %v1277 = vsel %vm1261, %v1244, %v1015
        %v1279 = vsel %vm1261, %v1246, %v1017
        %v1281 = vsel %vm1261, %v1248, %v1019
        %v1283 = vsel %vm1261, %v1250, %v1021
        %v1285 = vsel %vm1261, %v1252, %v1023
        %v1287 = vsel %vm1261, %v1254, %v1025
        %v1289 = vsel %vm1261, %v1256, %v1027
        %v1291 = vsel %vm1261, %v1258, %v1029
        %v1293 = vsel %vm1261, %v1260, %v1031
        %vm1294 = vcmask 171008
        %v1296 = vsel %vm1294, %v1263, %v1033
        %v1298 = vsel %vm1294, %v1265, %v1035
        %v1300 = vsel %vm1294, %v1267, %v1037
        %v1302 = vsel %vm1294, %v1269, %v1039
        %v1304 = vsel %vm1294, %v1271, %v1041
        %v1306 = vsel %vm1294, %v1273, %v1043
        %v1308 = vsel %vm1294, %v1275, %v1045
        %v1310 = vsel %vm1294, %v1277, %v1047
        %v1312 = vsel %vm1294, %v1279, %v1049
        %v1314 = vsel %vm1294, %v1281, %v1051
        %v1316 = vsel %vm1294, %v1283, %v1053
        %v1318 = vsel %vm1294, %v1285, %v1055
        %v1320 = vsel %vm1294, %v1287, %v1057
        %v1322 = vsel %vm1294, %v1289, %v1059
        %v1324 = vsel %vm1294, %v1291, %v1061
        %v1326 = vsel %vm1294, %v1293, %v1063
        %vm1327 = vcmask 195584
        %v1329 = vsel %vm1327, %v1296, %v1065
        %v1331 = vsel %vm1327, %v1298, %v1067
        %v1333 = vsel %vm1327, %v1300, %v1069
        %v1335 = vsel %vm1327, %v1302, %v1071
        %v1337 = vsel %vm1327, %v1304, %v1073
        %v1339 = vsel %vm1327, %v1306, %v1075
        %v1341 = vsel %vm1327, %v1308, %v1077
        %v1343 = vsel %vm1327, %v1310, %v1079
        %v1345 = vsel %vm1327, %v1312, %v1081
        %v1347 = vsel %vm1327, %v1314, %v1083
        %v1349 = vsel %vm1327, %v1316, %v1085
        %v1351 = vsel %vm1327, %v1318, %v1087
        %v1353 = vsel %vm1327, %v1320, %v1089
        %v1355 = vsel %vm1327, %v1322, %v1091
        %v1357 = vsel %vm1327, %v1324, %v1093
        %v1359 = vsel %vm1327, %v1326, %v1095
        %v1360 = vld [vmem:[%s210] sm:$0x3]
        %v1361 = vld [vmem:[%s210 + $0x2] sm:$0x3]
        %v1362 = vld [vmem:[%s210 + $0x4] sm:$0x3]
        %v1363 = vld [vmem:[%s210 + $0x6] sm:$0x3]
        %v1364 = vld [vmem:[%s210 + $0x8] sm:$0x3]
        %v1365 = vld [vmem:[%s210 + $0xa] sm:$0x3]
        %v1366 = vld [vmem:[%s210 + $0xc] sm:$0x3]
        %v1367 = vld [vmem:[%s210 + $0xe] sm:$0x3]
        %v1368 = vld [vmem:[%s210 + $0x10] sm:$0x3]
        %v1378 = vrot.slane %v1360, 1
        %v1379 = vrot.slane %v1360, 2
        %v1380 = vrot.slane %v1360, 3
        %v1381 = vrot.slane %v1361, 1
        %v1382 = vrot.slane %v1361, 2
        %v1383 = vrot.slane %v1361, 3
        %v1384 = vrot.slane %v1362, 1
        %v1385 = vrot.slane %v1362, 2
        %v1386 = vrot.slane %v1362, 3
        %v1387 = vrot.slane %v1363, 1
        %v1388 = vrot.slane %v1363, 2
        %v1389 = vrot.slane %v1363, 3
        %v1390 = vrot.slane %v1364, 1
        %v1391 = vrot.slane %v1364, 2
        %v1392 = vrot.slane %v1364, 3
        %v1393 = vrot.slane %v1365, 1
        %v1394 = vrot.slane %v1365, 2
        %v1395 = vrot.slane %v1365, 3
        %v1396 = vrot.slane %v1366, 1
        %v1397 = vrot.slane %v1366, 2
        %v1398 = vrot.slane %v1366, 3
        %v1399 = vrot.slane %v1367, 1
        %v1400 = vrot.slane %v1367, 2
        %v1401 = vrot.slane %v1367, 3
        %v1402 = vrot.slane %v1368, 1
        %v1403 = vrot.slane %v1368, 2
        %v1404 = vrot.slane %v1368, 3
        %vm1405 = vcmask 1040384
        %v1408 = vsel %vm1405, %v1360, %v1378
        %vm1409 = vcmask 1042434
        %v1412 = vsel %vm1409, %v1379, %v1380
        %vm1413 = vcmask 1041408
        %v1414 = vsel %vm1413, %v1408, %v1412
        %vm1416 = vcmask 1041409
        %v1417 = vsel %vm1416, %v1360, %v1378
        %vm1418 = vcmask 1043459
        %v1419 = vsel %vm1418, %v1379, %v1380
        %vm1420 = vcmask 1042433
        %v1421 = vsel %vm1420, %v1417, %v1419
        %v1423 = vrot.slane %v1421, 1
        %v1426 = vsel %vm1405, %v1361, %v1381
        %v1429 = vsel %vm1409, %v1382, %v1383
        %v1430 = vsel %vm1413, %v1426, %v1429
        %v1432 = vsel %vm1416, %v1361, %v1381
        %v1433 = vsel %vm1418, %v1382, %v1383
        %v1434 = vsel %vm1420, %v1432, %v1433
        %v1436 = vrot.slane %v1434, 1
        %v1439 = vsel %vm1405, %v1362, %v1384
        %v1442 = vsel %vm1409, %v1385, %v1386
        %v1443 = vsel %vm1413, %v1439, %v1442
        %v1445 = vsel %vm1416, %v1362, %v1384
        %v1446 = vsel %vm1418, %v1385, %v1386
        %v1447 = vsel %vm1420, %v1445, %v1446
        %v1449 = vrot.slane %v1447, 1
        %v1452 = vsel %vm1405, %v1363, %v1387
        %v1455 = vsel %vm1409, %v1388, %v1389
        %v1456 = vsel %vm1413, %v1452, %v1455
        %v1458 = vsel %vm1416, %v1363, %v1387
        %v1459 = vsel %vm1418, %v1388, %v1389
        %v1460 = vsel %vm1420, %v1458, %v1459
        %v1462 = vrot.slane %v1460, 1
        %v1465 = vsel %vm1405, %v1364, %v1390
        %v1468 = vsel %vm1409, %v1391, %v1392
        %v1469 = vsel %vm1413, %v1465, %v1468
        %v1471 = vsel %vm1416, %v1364, %v1390
        %v1472 = vsel %vm1418, %v1391, %v1392
        %v1473 = vsel %vm1420, %v1471, %v1472
        %v1475 = vrot.slane %v1473, 1
        %v1478 = vsel %vm1405, %v1365, %v1393
        %v1481 = vsel %vm1409, %v1394, %v1395
        %v1482 = vsel %vm1413, %v1478, %v1481
        %v1484 = vsel %vm1416, %v1365, %v1393
        %v1485 = vsel %vm1418, %v1394, %v1395
        %v1486 = vsel %vm1420, %v1484, %v1485
        %v1488 = vrot.slane %v1486, 1
        %v1491 = vsel %vm1405, %v1366, %v1396
        %v1494 = vsel %vm1409, %v1397, %v1398
        %v1495 = vsel %vm1413, %v1491, %v1494
        %v1497 = vsel %vm1416, %v1366, %v1396
        %v1498 = vsel %vm1418, %v1397, %v1398
        %v1499 = vsel %vm1420, %v1497, %v1498
        %v1501 = vrot.slane %v1499, 1
        %v1504 = vsel %vm1405, %v1367, %v1399
        %v1507 = vsel %vm1409, %v1400, %v1401
        %v1508 = vsel %vm1413, %v1504, %v1507
        %v1510 = vsel %vm1416, %v1367, %v1399
        %v1511 = vsel %vm1418, %v1400, %v1401
        %v1512 = vsel %vm1420, %v1510, %v1511
        %v1514 = vrot.slane %v1512, 1
        %v1517 = vsel %vm1405, %v1368, %v1402
        %v1520 = vsel %vm1409, %v1403, %v1404
        %v1521 = vsel %vm1413, %v1517, %v1520
        %v1523 = vsel %vm1416, %v1368, %v1402
        %v1524 = vsel %vm1418, %v1403, %v1404
        %v1525 = vsel %vm1420, %v1523, %v1524
        %v1527 = vrot.slane %v1525, 1
        %v1528 = vunpack.i.l.s16 %v1414
        %v1529 = vunpack.i.h.s16 %v1414
        %v1530 = vunpack.i.l.s16 %v1423
        %v1531 = vunpack.i.l.s16 %v1430
        %v1532 = vunpack.i.h.s16 %v1430
        %v1533 = vunpack.i.l.s16 %v1436
        %v1534 = vunpack.i.l.s16 %v1443
        %v1535 = vunpack.i.h.s16 %v1443
        %v1536 = vunpack.i.l.s16 %v1449
        %v1537 = vunpack.i.l.s16 %v1456
        %v1538 = vunpack.i.h.s16 %v1456
        %v1539 = vunpack.i.l.s16 %v1462
        %v1540 = vunpack.i.l.s16 %v1469
        %v1541 = vunpack.i.h.s16 %v1469
        %v1542 = vunpack.i.l.s16 %v1475
        %v1543 = vunpack.i.l.s16 %v1482
        %v1544 = vunpack.i.h.s16 %v1482
        %v1545 = vunpack.i.l.s16 %v1488
        %v1546 = vunpack.i.l.s16 %v1495
        %v1547 = vunpack.i.h.s16 %v1495
        %v1548 = vunpack.i.l.s16 %v1501
        %v1549 = vunpack.i.l.s16 %v1508
        %v1550 = vunpack.i.h.s16 %v1508
        %v1551 = vunpack.i.l.s16 %v1514
        %v1552 = vunpack.i.l.s16 %v1521
        %v1553 = vunpack.i.h.s16 %v1521
        %v1554 = vunpack.i.l.s16 %v1527
        %v1555 = vld [vmem:[%s213] sm:$0x1]
        %v1557 = vperm.slane %v1555, 0
        %v1559 = vpack.i.b16 %v1529, %v1528
        %v1560 = vpack.i.b16 %v1531, %v1530
        %v1561 = vpack.i.b16 %v1533, %v1532
        %v1562 = vpack.i.b16 %v1535, %v1534
        %v1563 = vpack.i.b16 %v1537, %v1536
        %v1564 = vpack.i.b16 %v1539, %v1538
        %v1565 = vpack.i.b16 %v1541, %v1540
        %v1566 = vpack.i.b16 %v1543, %v1542
        %v1567 = vpack.i.b16 %v1545, %v1544
        %v1568 = vpack.i.b16 %v1547, %v1546
        %v1569 = vpack.i.b16 %v1549, %v1548
        %v1570 = vpack.i.b16 %v1551, %v1550
        %v1571 = vpack.i.b16 %v1553, %v1552
        %1574 = vst [vmem:[#allocation1] ss:$9 sm:$0xff] %v1559
        %s1576 = scalar_lea.vmem [#allocation1], 1
        %1577 = vst [vmem:[%s1576] ss:$9 sm:$0xff] %v1560
        %s1579 = scalar_lea.vmem [#allocation1], 2
        %1580 = vst [vmem:[%s1579] ss:$9 sm:$0xff] %v1561
        %s1582 = scalar_lea.vmem [#allocation1], 3
        %1583 = vst [vmem:[%s1582] ss:$9 sm:$0xff] %v1562
        %s1585 = scalar_lea.vmem [#allocation1], 4
        %1586 = vst [vmem:[%s1585] ss:$9 sm:$0xff] %v1563
        %s1588 = scalar_lea.vmem [#allocation1], 5
        %1589 = vst [vmem:[%s1588] ss:$9 sm:$0xff] %v1564
        %s1591 = scalar_lea.vmem [#allocation1], 6
        %1592 = vst [vmem:[%s1591] ss:$9 sm:$0xff] %v1565
        %s1594 = scalar_lea.vmem [#allocation1], 7
        %1595 = vst [vmem:[%s1594] ss:$9 sm:$0xff] %v1566
        %v1596 = vld [vmem:[#allocation1] sm:$0xff]
        %1598 = vst [vmem:[#allocation1] ss:$9 sm:$0xff] %v1567
        %1600 = vst [vmem:[%s1576] ss:$9 sm:$0xff] %v1568
        %1602 = vst [vmem:[%s1579] ss:$9 sm:$0xff] %v1569
        %1604 = vst [vmem:[%s1582] ss:$9 sm:$0xff] %v1570
        %1606 = vst [vmem:[%s1585] ss:$9 sm:$0xff] %v1571
        %1608 = vst [vmem:[%s1588] ss:$9 sm:$0xff] %v1554
        %v1609 = vld [vmem:[#allocation1] sm:$0xff]
        %vm1611 = vcmask 220160
        %v1612 = vsel %vm1611, %v1329, 0
        %v1614 = vsel %vm1611, %v1331, 0
        %v1616 = vsel %vm1611, %v1333, 0
        %v1618 = vsel %vm1611, %v1335, 0
        %v1620 = vsel %vm1611, %v1337, 0
        %v1622 = vsel %vm1611, %v1339, 0
        %v1624 = vsel %vm1611, %v1341, 0
        %v1626 = vsel %vm1611, %v1343, 0
        %v1628 = vsel %vm1611, %v1345, 0
        %v1630 = vsel %vm1611, %v1347, 0
        %v1632 = vsel %vm1611, %v1349, 0
        %v1634 = vsel %vm1611, %v1351, 0
        %v1636 = vsel %vm1611, %v1353, 0
        %v1638 = vsel %vm1611, %v1355, 0
        %v1640 = vsel %vm1611, %v1357, 0
        %v1642 = vsel %vm1611, %v1359, 0
        %vm1644 = vcmask 1044480
        %vm1645 = vcmask 1045504
        %v1646 = vsel %vm1644, 4294967295, 65535
        %v1647 = vsel %vm1645, %v1646, 0
        %v1648 = vand.u32 %v1609, %v1647
        %1650 = vmatpush.bf16.msra.mxu0 0
        %1651 = vmatpush.bf16.msra.mxu0 0
        %1652 = vmatpush.bf16.msra.mxu0 0
        %1653 = vmatpush.bf16.msra.mxu0 0
        %1654 = vmatpush.bf16.msra.mxu0 0
        %1655 = vmatpush.bf16.msra.mxu0 0
        %1656 = vmatpush.bf16.msra.mxu0 %v1648
        %1657 = vmatpush.bf16.msra.mxu0 %v1596
        %1658 = vmatmul.bf16.gmra.mxu0 %v1612
        %v1659 = vpop.f32.mrf.mxu0
        %v1660 = vadd.f32 %v1557, %v1659
        %v1661 = vpop.f32.mrf.mxu0
        %v1662 = vadd.f32 %v1557, %v1661
        %1663 = vmatmul.bf16.gmra.mxu0 %v1614
        %v1664 = vpop.f32.mrf.mxu0
        %v1665 = vadd.f32 %v1557, %v1664
        %v1666 = vpop.f32.mrf.mxu0
        %v1667 = vadd.f32 %v1557, %v1666
        %1668 = vmatmul.bf16.gmra.mxu0 %v1616
        %v1669 = vpop.f32.mrf.mxu0
        %v1670 = vadd.f32 %v1557, %v1669
        %v1671 = vpop.f32.mrf.mxu0
        %v1672 = vadd.f32 %v1557, %v1671
        %1673 = vmatmul.bf16.gmra.mxu0 %v1618
        %v1674 = vpop.f32.mrf.mxu0
        %v1675 = vadd.f32 %v1557, %v1674
        %v1676 = vpop.f32.mrf.mxu0
        %v1677 = vadd.f32 %v1557, %v1676
        %1678 = vmatmul.bf16.gmra.mxu0 %v1620
        %v1679 = vpop.f32.mrf.mxu0
        %v1680 = vadd.f32 %v1557, %v1679
        %v1681 = vpop.f32.mrf.mxu0
        %v1682 = vadd.f32 %v1557, %v1681
        %1683 = vmatmul.bf16.gmra.mxu0 %v1622
        %v1684 = vpop.f32.mrf.mxu0
        %v1685 = vadd.f32 %v1557, %v1684
        %v1686 = vpop.f32.mrf.mxu0
        %v1687 = vadd.f32 %v1557, %v1686
        %1688 = vmatmul.bf16.gmra.mxu0 %v1624
        %v1689 = vpop.f32.mrf.mxu0
        %v1690 = vadd.f32 %v1557, %v1689
        %v1691 = vpop.f32.mrf.mxu0
        %v1692 = vadd.f32 %v1557, %v1691
        %1693 = vmatmul.bf16.gmra.mxu0 %v1626
        %v1694 = vpop.f32.mrf.mxu0
        %v1695 = vadd.f32 %v1557, %v1694
        %v1696 = vpop.f32.mrf.mxu0
        %v1697 = vadd.f32 %v1557, %v1696
        %1698 = vmatmul.bf16.gmra.mxu0 %v1628
        %v1699 = vpop.f32.mrf.mxu0
        %v1700 = vadd.f32 %v1557, %v1699
        %v1701 = vpop.f32.mrf.mxu0
        %v1702 = vadd.f32 %v1557, %v1701
        %1703 = vmatmul.bf16.gmra.mxu0 %v1630
        %v1704 = vpop.f32.mrf.mxu0
        %v1705 = vadd.f32 %v1557, %v1704
        %v1706 = vpop.f32.mrf.mxu0
        %v1707 = vadd.f32 %v1557, %v1706
        %1708 = vmatmul.bf16.gmra.mxu0 %v1632
        %v1709 = vpop.f32.mrf.mxu0
        %v1710 = vadd.f32 %v1557, %v1709
        %v1711 = vpop.f32.mrf.mxu0
        %v1712 = vadd.f32 %v1557, %v1711
        %1713 = vmatmul.bf16.gmra.mxu0 %v1634
        %v1714 = vpop.f32.mrf.mxu0
        %v1715 = vadd.f32 %v1557, %v1714
        %v1716 = vpop.f32.mrf.mxu0
        %v1717 = vadd.f32 %v1557, %v1716
        %1718 = vmatmul.bf16.gmra.mxu0 %v1636
        %v1719 = vpop.f32.mrf.mxu0
        %v1720 = vadd.f32 %v1557, %v1719
        %v1721 = vpop.f32.mrf.mxu0
        %v1722 = vadd.f32 %v1557, %v1721
        %1723 = vmatmul.bf16.gmra.mxu0 %v1638
        %v1724 = vpop.f32.mrf.mxu0
        %v1725 = vadd.f32 %v1557, %v1724
        %v1726 = vpop.f32.mrf.mxu0
        %v1727 = vadd.f32 %v1557, %v1726
        %1728 = vmatmul.bf16.gmra.mxu0 %v1640
        %v1729 = vpop.f32.mrf.mxu0
        %v1730 = vadd.f32 %v1557, %v1729
        %v1731 = vpop.f32.mrf.mxu0
        %v1732 = vadd.f32 %v1557, %v1731
        %1733 = vmatmul.bf16.gmra.mxu0 %v1642
        %v1734 = vpop.f32.mrf.mxu0
        %v1735 = vadd.f32 %v1557, %v1734
        %v1736 = vpop.f32.mrf.mxu0
        %v1737 = vadd.f32 %v1557, %v1736
        %1738 = vdwg.mxu0
        %v1739 = vmax.f32 %v1660, 0.0
        %v1740 = vmax.f32 %v1662, 0.0
        %v1741 = vmax.f32 %v1665, 0.0
        %v1742 = vmax.f32 %v1667, 0.0
        %v1743 = vmax.f32 %v1670, 0.0
        %v1744 = vmax.f32 %v1672, 0.0
        %v1745 = vmax.f32 %v1675, 0.0
        %v1746 = vmax.f32 %v1677, 0.0
        %v1747 = vmax.f32 %v1680, 0.0
        %v1748 = vmax.f32 %v1682, 0.0
        %v1749 = vmax.f32 %v1685, 0.0
        %v1750 = vmax.f32 %v1687, 0.0
        %v1751 = vmax.f32 %v1690, 0.0
        %v1752 = vmax.f32 %v1692, 0.0
        %v1753 = vmax.f32 %v1695, 0.0
        %v1754 = vmax.f32 %v1697, 0.0
        %v1755 = vmax.f32 %v1700, 0.0
        %v1756 = vmax.f32 %v1702, 0.0
        %v1757 = vmax.f32 %v1705, 0.0
        %v1758 = vmax.f32 %v1707, 0.0
        %v1759 = vmax.f32 %v1710, 0.0
        %v1760 = vmax.f32 %v1712, 0.0
        %v1761 = vmax.f32 %v1715, 0.0
        %v1762 = vmax.f32 %v1717, 0.0
        %v1763 = vmax.f32 %v1720, 0.0
        %v1764 = vmax.f32 %v1722, 0.0
        %v1765 = vmax.f32 %v1725, 0.0
        %v1766 = vmax.f32 %v1727, 0.0
        %v1767 = vmax.f32 %v1730, 0.0
        %v1768 = vmax.f32 %v1732, 0.0
        %v1769 = vmax.f32 %v1735, 0.0
        %v1770 = vmax.f32 %v1737, 0.0
        %vm1771 = vcmask 523264
        %1772 = vst.msk [vmem:[%s201] sm:$0xff] %vm1771, %v1739
        %1773 = vst.msk [vmem:[%s201 + $0x8] sm:$0xff] %vm1771, %v1740
        %1774 = vst.msk [vmem:[%s201 + $0x10] sm:$0xff] %vm1771, %v1741
        %1775 = vst.msk [vmem:[%s201 + $0x18] sm:$0xff] %vm1771, %v1742
        %1776 = vst.msk [vmem:[%s201 + $0x20] sm:$0xff] %vm1771, %v1743
        %1777 = vst.msk [vmem:[%s201 + $0x28] sm:$0xff] %vm1771, %v1744
        %1778 = vst.msk [vmem:[%s201 + $0x30] sm:$0xff] %vm1771, %v1745
        %1779 = vst.msk [vmem:[%s201 + $0x38] sm:$0xff] %vm1771, %v1746
        %1780 = vst.msk [vmem:[%s201 + $0x40] sm:$0xff] %vm1771, %v1747
        %1781 = vst.msk [vmem:[%s201 + $0x48] sm:$0xff] %vm1771, %v1748
        %1782 = vst.msk [vmem:[%s201 + $0x50] sm:$0xff] %vm1771, %v1749
        %1783 = vst.msk [vmem:[%s201 + $0x58] sm:$0xff] %vm1771, %v1750
        %1784 = vst.msk [vmem:[%s201 + $0x60] sm:$0xff] %vm1771, %v1751
        %1785 = vst.msk [vmem:[%s201 + $0x68] sm:$0xff] %vm1771, %v1752
        %1786 = vst.msk [vmem:[%s201 + $0x70] sm:$0xff] %vm1771, %v1753
        %1787 = vst.msk [vmem:[%s201 + $0x78] sm:$0xff] %vm1771, %v1754
        %1788 = vst.msk [vmem:[%s201 + $0x80] sm:$0xff] %vm1771, %v1755
        %1789 = vst.msk [vmem:[%s201 + $0x88] sm:$0xff] %vm1771, %v1756
        %1790 = vst.msk [vmem:[%s201 + $0x90] sm:$0xff] %vm1771, %v1757
        %1791 = vst.msk [vmem:[%s201 + $0x98] sm:$0xff] %vm1771, %v1758
        %1792 = vst.msk [vmem:[%s201 + $0xa0] sm:$0xff] %vm1771, %v1759
        %1793 = vst.msk [vmem:[%s201 + $0xa8] sm:$0xff] %vm1771, %v1760
        %1794 = vst.msk [vmem:[%s201 + $0xb0] sm:$0xff] %vm1771, %v1761
        %1795 = vst.msk [vmem:[%s201 + $0xb8] sm:$0xff] %vm1771, %v1762
        %1796 = vst.msk [vmem:[%s201 + $0xc0] sm:$0xff] %vm1771, %v1763
        %1797 = vst.msk [vmem:[%s201 + $0xc8] sm:$0xff] %vm1771, %v1764
        %1798 = vst.msk [vmem:[%s201 + $0xd0] sm:$0xff] %vm1771, %v1765
        %1799 = vst.msk [vmem:[%s201 + $0xd8] sm:$0xff] %vm1771, %v1766
        %1800 = vst.msk [vmem:[%s201 + $0xe0] sm:$0xff] %vm1771, %v1767
        %1801 = vst.msk [vmem:[%s201 + $0xe8] sm:$0xff] %vm1771, %v1768
        %1802 = vst.msk [vmem:[%s201 + $0xf0] sm:$0xff] %vm1771, %v1769
        %1803 = vst.msk [vmem:[%s201 + $0xf8] sm:$0xff] %vm1771, %v1770
        %s1804 = sand.u32 %s117, 1
        %s1805 = scalar_lea.sflag [#allocation3], %s1804
        %s1806 = sand.u32 %s117, 1
        %s1807 = smul.addr %s1806, 256
        %s1808 = scalar_lea.vmem [#allocation2], %s1807
        // Predicated region
        $region33: #{tpu_custom_call.1} parent=31 // pred_check
          %p1809 = pneg %p127
        $region34: #{tpu_custom_call.1} parent=31 // pred_check_branch
          %1811 = sbr.rel (%p1809) target = $region36
        $region35: #{tpu_custom_call.1} parent=31 // pred_region
          %1813 = vsyncadd %s1805, 0
          %s1814 = smul.addr %s22, 32
          %s1815 = sadd.s32 %s21, %s1814
          %s1816 = smul.addr %s1815, 8
          %s1817 = scalar_lea.hbm %s3, %s1816
          %s1818 = sshll.u32 %s1808, 4
          %s1819 = int_to_ptr.vmem [resolvable:$true] %s1818
          %s1820 = sshll.u32 %s1817, 4
          %s1821 = int_to_ptr.hbm [resolvable:$true] %s1820
          %1826 = dma.vmem_to_hbm [thread:$0]  %s1819, 4096, %s1821, %s1805, 128, 128, 8
        $region36: #{tpu_custom_call.1} parent=31 // pred_fallthru
          _
      $region32: #{tpu_custom_call.1} parent=5 // pred_fallthru
        _
      %p1827 = scmp.le.s32.totalorder 2, %s12
      // Predicated region
      $region37: #{tpu_custom_call.1} parent=5 // pred_check
        %p1828 = pneg %p1827
      $region38: #{tpu_custom_call.1} parent=5 // pred_check_branch
        %1830 = sbr.rel (%p1828) target = $region40
      $region39: #{tpu_custom_call.1} parent=5 // pred_region
        %s1831 = ssub.s32 %s12, 2
        // Predicated region
        $region41: #{tpu_custom_call.1} parent=39 // pred_check
          %p1832 = pneg %p133
        $region42: #{tpu_custom_call.1} parent=39 // pred_check_branch
          %1834 = sbr.rel (%p1832) target = $region44
        $region43: #{tpu_custom_call.1} parent=39 // pred_region
          %s1835 = sand.u32 %s118, 1
          %s1836 = scalar_lea.sflag [#allocation3], %s1835
          %s1837 = sand.u32 %s118, 1
          %s1838 = smul.addr %s1837, 256
          %s1839 = scalar_lea.vmem [#allocation2], %s1838
          %1841 = dma.done %s1836, 4096
        $region44: #{tpu_custom_call.1} parent=39 // pred_fallthru
          _
      $region40: #{tpu_custom_call.1} parent=5 // pred_fallthru
        _
    $region6: #{tpu_custom_call.1} parent=1 // loop_footer
      %s16 = sadd.s32 1, %s12
    $region7: #{tpu_custom_call.1} parent=1 // loop_footer_branch
      %11 = sbr.rel target = $region3
    $region8: #{tpu_custom_call.1} parent=1 // loop_exit
      _
    %1842 = vsyncpa [#allocation3], 1
    %s1843 = scalar_lea.sflag [#allocation3], 1
    %1844 = vsyncpa %s1843, 1

</llo_original>
